<compile_context>
chip_gen: v6e
topology: v6e:2x2x1
jax: 0.10.0
libtpu: 0.0.40
codegen_flags: <defaults>
</compile_context>

<pallas_src>
import jax
import jax.numpy as jnp
from jax.experimental import pallas as pl
from jax.experimental.pallas import tpu as pltpu


def _round_up(x, m):
    return (x + m - 1) // m * m


def snn_kernel(t_ref, c_ref, w1_ref, b1_ref, w2t_ref, w2c_ref, b2_ref, o_ref):
    """One batch tile (batch on sublanes).

    t_ref, c_ref : (TB, E) f32  pooled topic / content embeddings
    w1_ref       : (E, H)  f32  fc1 weight
    b1_ref       : (1, H)  f32  fc1 bias
    w2t_ref      : (H, 1)  f32  fc2 weight rows for the topic branch   (w2[:H])
    w2c_ref      : (H, 1)  f32  fc2 weight rows for the content branch (w2[H:])
    b2_ref       : (1, 1)  f32  fc2 bias
    o_ref        : (TB, 1) f32  sigmoid output
    """
    # Shared fc1 + ReLU on the MXU (f32 in, f32 accumulate).
    t_hid = jnp.maximum(
        jnp.dot(t_ref[...], w1_ref[...], preferred_element_type=jnp.float32)
        + b1_ref[...], 0.0)                                        # (TB, H)
    c_hid = jnp.maximum(
        jnp.dot(c_ref[...], w1_ref[...], preferred_element_type=jnp.float32)
        + b1_ref[...], 0.0)                                        # (TB, H)

    # fc2(concat(t_hid, c_hid)) == t_hid @ w2[:H] + c_hid @ w2[H:] + b2.
    # Two narrow MXU dots instead of concat + VPU multiply + sublane reduce.
    logit = (jnp.dot(t_hid, w2t_ref[...], preferred_element_type=jnp.float32)
             + jnp.dot(c_hid, w2c_ref[...], preferred_element_type=jnp.float32)
             + b2_ref[...])                                        # (TB, 1)
    o_ref[...] = jax.nn.sigmoid(logit).astype(o_ref.dtype)


def snn_forward(topics, content, params):
    """topics: (B, Lt) int32, content: (B, Lc) int32 -> (B, 1) f32."""
    emb = params["embedding"]
    w1, b1 = params["w1"], params["b1"]
    w2, b2 = params["w2"], params["b2"]

    B = topics.shape[0]
    E = emb.shape[1]
    H = w1.shape[1]

    # TODO(synk): the data-dependent embedding gather has no clean rectangular
    # BlockSpec form; gather + sequence mean stay in XLA glue (fused reduce) and
    # only the pooled (B, E) f32 tensors enter the kernel -> HBM traffic into
    # the kernel drops by ~L x versus shipping (B, L, E).
    t_avg = jnp.mean(jnp.take(emb, topics, axis=0), axis=1)       # (B, E) f32
    c_avg = jnp.mean(jnp.take(emb, content, axis=0), axis=1)      # (B, E) f32

    # Batch tile: multiple of 256 (MXU-friendly M), capped at 2048 so the
    # double-buffered f32 input blocks stay ~8 MiB.  Ragged last block handled
    # by Pallas (no materializing pad); OOB output rows are never written back.
    TB = min(2048, _round_up(B, 256))
    grid = (pl.cdiv(B, TB),)

    w1f = w1.astype(jnp.float32)                         # (E, H)
    b1r = b1.reshape(1, H).astype(jnp.float32)           # (1, H)
    w2t = w2[:H].reshape(H, 1).astype(jnp.float32)       # (H, 1)
    w2c = w2[H:].reshape(H, 1).astype(jnp.float32)       # (H, 1)
    b2r = b2.reshape(1, 1).astype(jnp.float32)           # (1, 1)

    const = lambda i: (0, 0)  # weights: same block every step -> VMEM resident

    cost = pl.CostEstimate(
        flops=4 * B * E * H + 8 * B * H,                 # 2x fc1 + 2x fc2 dots
        transcendentals=B,                               # sigmoid
        bytes_accessed=(2 * B * E + B) * 4 + (E * H + 3 * H + 2) * 4,
    )

    out = pl.pallas_call(
        snn_kernel,
        out_shape=jax.ShapeDtypeStruct((B, 1), jnp.float32),
        grid=grid,
        in_specs=[
            pl.BlockSpec((TB, E), lambda i: (i, 0)),     # pooled topics
            pl.BlockSpec((TB, E), lambda i: (i, 0)),     # pooled content
            pl.BlockSpec((E, H), const),                 # w1
            pl.BlockSpec((1, H), const),                 # b1
            pl.BlockSpec((H, 1), const),                 # w2[:H]
            pl.BlockSpec((H, 1), const),                 # w2[H:]
            pl.BlockSpec((1, 1), const),                 # b2
        ],
        out_specs=pl.BlockSpec((TB, 1), lambda i: (i, 0)),
        compiler_params=pltpu.CompilerParams(
            dimension_semantics=("parallel",),           # v7x: batch over 2 TCs
            vmem_limit_bytes=32 * 1024 * 1024),
        cost_estimate=cost,
    )(t_avg, c_avg, w1f, b1r, w2t, w2c, b2r)

    return out


def init_params(key, vocab_size, embed_dim, hidden_dim):
    k_emb, k_w1, k_b1, k_w2, k_b2 = jax.random.split(key, 5)
    return {
        "embedding": jax.random.normal(k_emb, (vocab_size, embed_dim),
                                       jnp.float32),
        "w1": jax.random.normal(k_w1, (embed_dim, hidden_dim),
                                jnp.float32) * 0.1,
        "b1": jax.random.normal(k_b1, (hidden_dim,), jnp.float32) * 0.1,
        "w2": jax.random.normal(k_w2, (2 * hidden_dim, 1), jnp.float32) * 0.1,
        "b2": jax.random.normal(k_b2, (1,), jnp.float32) * 0.1,
    }


def reference_forward(topics, content, params):
    """Pure-JAX f32 reference mirroring the PyTorch forward semantics."""
    emb, w1, b1, w2, b2 = (params["embedding"], params["w1"], params["b1"],
                           params["w2"], params["b2"])
    t_avg = jnp.mean(jnp.take(emb, topics, axis=0), axis=1)
    c_avg = jnp.mean(jnp.take(emb, content, axis=0), axis=1)
    t_hid = jax.nn.relu(t_avg @ w1 + b1)
    c_hid = jax.nn.relu(c_avg @ w1 + b1)
    hid = jnp.concatenate([t_hid, c_hid], axis=-1)
    return jax.nn.sigmoid(hid @ w2 + b2)


if __name__ == "__main__":
    # Small deterministic example at the module's real feature sizes
    # (embed_dim=256, hidden_dim=128) with a toy vocab / batch / sequences.
    vocab_size, embed_dim, hidden_dim = 1000, 256, 128
    batch, seq_topics, seq_content = 16, 8, 12

    key = jax.random.PRNGKey(0)
    k_params, k_t, k_c = jax.random.split(key, 3)

    params = init_params(k_params, vocab_size, embed_dim, hidden_dim)
    topics = jax.random.randint(k_t, (batch, seq_topics), 0, vocab_size,
                                dtype=jnp.int32)
    content = jax.random.randint(k_c, (batch, seq_content), 0, vocab_size,
                                 dtype=jnp.int32)

    out = jax.jit(snn_forward)(topics, content, params)
    out = jax.block_until_ready(out)

    ref = reference_forward(topics, content, params)
    assert out.shape == (batch, 1), out.shape
    # MXU default-precision f32 matmuls -> modest tolerance vs pure-f32 ref.
    assert jnp.allclose(out, ref, atol=2e-2, rtol=2e-2), (out, ref)

    print("KERNEL_OK")
</pallas_src>

<mosaic_0001>
module attributes {stable_mosaic.version = 11 : i64} {
  func.func @snn_kernel(%arg0: i32, %arg1: memref<256x256xf32, #tpu.memory_space<vmem>>, %arg2: memref<256x256xf32, #tpu.memory_space<vmem>>, %arg3: memref<256x128xf32, #tpu.memory_space<vmem>>, %arg4: memref<1x128xf32, #tpu.memory_space<vmem>>, %arg5: memref<128x1xf32, #tpu.memory_space<vmem>>, %arg6: memref<128x1xf32, #tpu.memory_space<vmem>>, %arg7: memref<1x1xf32, #tpu.memory_space<vmem>>, %arg8: memref<256x1xf32, #tpu.memory_space<vmem>>) attributes {dimension_semantics = [#tpu.dimension_semantics<parallel>], iteration_bounds = array<i64: 1>, scalar_prefetch = 0 : i64, scratch_operands = 0 : i64, tpu.core_type = #tpu.core_type<tc>, window_params = [{transform_indices = @transform_0, window_bounds = array<i64: 256, 256>}, {transform_indices = @transform_1, window_bounds = array<i64: 256, 256>}, {pipeline_mode = #tpu.pipeline_mode<synchronous>, transform_indices = @transform_2, window_bounds = array<i64: 256, 128>}, {pipeline_mode = #tpu.pipeline_mode<synchronous>, transform_indices = @transform_3, window_bounds = array<i64: 1, 128>}, {pipeline_mode = #tpu.pipeline_mode<synchronous>, transform_indices = @transform_4, window_bounds = array<i64: 128, 1>}, {pipeline_mode = #tpu.pipeline_mode<synchronous>, transform_indices = @transform_5, window_bounds = array<i64: 128, 1>}, {pipeline_mode = #tpu.pipeline_mode<synchronous>, transform_indices = @transform_6, window_bounds = array<i64: 1, 1>}, {transform_indices = @transform_7, window_bounds = array<i64: 256, 1>}]} {
    %c0 = arith.constant 0 : index
    %c0_0 = arith.constant 0 : index
    %0 = vector.load %arg1[%c0, %c0_0] : memref<256x256xf32, #tpu.memory_space<vmem>>, vector<256x256xf32>
    %c0_1 = arith.constant 0 : index
    %c0_2 = arith.constant 0 : index
    %1 = vector.load %arg3[%c0_1, %c0_2] : memref<256x128xf32, #tpu.memory_space<vmem>>, vector<256x128xf32>
    %cst = arith.constant dense<0.000000e+00> : vector<256x128xf32>
    %2 = tpu.matmul %0, %1, %cst {dimension_numbers = #tpu.dot_dimension_numbers<[1], [0], [0], [1], [0, 0, 1, 1], [], []>} : vector<256x256xf32>, vector<256x128xf32>, vector<256x128xf32> -> vector<256x128xf32>
    %c0_3 = arith.constant 0 : index
    %c0_4 = arith.constant 0 : index
    %3 = vector.load %arg4[%c0_3, %c0_4] : memref<1x128xf32, #tpu.memory_space<vmem>>, vector<1x128xf32>
    %4 = vector.broadcast %3 : vector<1x128xf32> to vector<256x128xf32>
    %5 = arith.addf %2, %4 : vector<256x128xf32>
    %cst_5 = arith.constant 0.000000e+00 : f32
    %6 = vector.broadcast %cst_5 : f32 to vector<256x128xf32>
    %7 = arith.maximumf %5, %6 : vector<256x128xf32>
    %c0_6 = arith.constant 0 : index
    %c0_7 = arith.constant 0 : index
    %8 = vector.load %arg2[%c0_6, %c0_7] : memref<256x256xf32, #tpu.memory_space<vmem>>, vector<256x256xf32>
    %c0_8 = arith.constant 0 : index
    %c0_9 = arith.constant 0 : index
    %9 = vector.load %arg3[%c0_8, %c0_9] : memref<256x128xf32, #tpu.memory_space<vmem>>, vector<256x128xf32>
    %cst_10 = arith.constant dense<0.000000e+00> : vector<256x128xf32>
    %10 = tpu.matmul %8, %9, %cst_10 {dimension_numbers = #tpu.dot_dimension_numbers<[1], [0], [0], [1], [0, 0, 1, 1], [], []>} : vector<256x256xf32>, vector<256x128xf32>, vector<256x128xf32> -> vector<256x128xf32>
    %c0_11 = arith.constant 0 : index
    %c0_12 = arith.constant 0 : index
    %11 = vector.load %arg4[%c0_11, %c0_12] : memref<1x128xf32, #tpu.memory_space<vmem>>, vector<1x128xf32>
    %12 = vector.broadcast %11 : vector<1x128xf32> to vector<256x128xf32>
    %13 = arith.addf %10, %12 : vector<256x128xf32>
    %cst_13 = arith.constant 0.000000e+00 : f32
    %14 = vector.broadcast %cst_13 : f32 to vector<256x128xf32>
    %15 = arith.maximumf %13, %14 : vector<256x128xf32>
    %c0_14 = arith.constant 0 : index
    %c0_15 = arith.constant 0 : index
    %16 = vector.load %arg5[%c0_14, %c0_15] : memref<128x1xf32, #tpu.memory_space<vmem>>, vector<128x1xf32>
    %cst_16 = arith.constant dense<0.000000e+00> : vector<256x1xf32>
    %17 = tpu.matmul %7, %16, %cst_16 {dimension_numbers = #tpu.dot_dimension_numbers<[1], [0], [0], [1], [0, 0, 1, 1], [], []>} : vector<256x128xf32>, vector<128x1xf32>, vector<256x1xf32> -> vector<256x1xf32>
    %c0_17 = arith.constant 0 : index
    %c0_18 = arith.constant 0 : index
    %18 = vector.load %arg6[%c0_17, %c0_18] : memref<128x1xf32, #tpu.memory_space<vmem>>, vector<128x1xf32>
    %cst_19 = arith.constant dense<0.000000e+00> : vector<256x1xf32>
    %19 = tpu.matmul %15, %18, %cst_19 {dimension_numbers = #tpu.dot_dimension_numbers<[1], [0], [0], [1], [0, 0, 1, 1], [], []>} : vector<256x128xf32>, vector<128x1xf32>, vector<256x1xf32> -> vector<256x1xf32>
    %20 = arith.addf %17, %19 : vector<256x1xf32>
    %c0_20 = arith.constant 0 : index
    %c0_21 = arith.constant 0 : index
    %21 = vector.load %arg7[%c0_20, %c0_21] : memref<1x1xf32, #tpu.memory_space<vmem>>, vector<1x1xf32>
    %22 = vector.broadcast %21 : vector<1x1xf32> to vector<256x1xf32>
    %23 = arith.addf %20, %22 : vector<256x1xf32>
    %24 = arith.negf %23 : vector<256x1xf32>
    %25 = math.exp %24 : vector<256x1xf32>
    %cst_22 = arith.constant 1.000000e+00 : f32
    %26 = vector.broadcast %cst_22 : f32 to vector<256x1xf32>
    %27 = arith.addf %26, %25 : vector<256x1xf32>
    %28 = arith.divf %26, %27 : vector<256x1xf32>
    %c0_23 = arith.constant 0 : index
    %c0_24 = arith.constant 0 : index
    %29 = vector.load %arg8[%c0_23, %c0_24] : memref<256x1xf32, #tpu.memory_space<vmem>>, vector<256x1xf32>
    tpu.vector_store %arg8[%c0_23, %c0_24], %28 {strides = array<i32>} : memref<256x1xf32, #tpu.memory_space<vmem>>, vector<256x1xf32>,
    return
  }
  func.func @transform_0(%arg0: i32) -> (i32, i32) {
    %c0_i32 = arith.constant 0 : i32
    %c0_i32_0 = arith.constant 0 : i32
    return %arg0, %c0_i32 : i32, i32
  }
  func.func @transform_1(%arg0: i32) -> (i32, i32) {
    %c0_i32 = arith.constant 0 : i32
    %c0_i32_0 = arith.constant 0 : i32
    return %arg0, %c0_i32 : i32, i32
  }
  func.func @transform_2(%arg0: i32) -> (i32, i32) {
    %c0_i32 = arith.constant 0 : i32
    %c0_i32_0 = arith.constant 0 : i32
    %c0_i32_1 = arith.constant 0 : i32
    return %c0_i32, %c0_i32_0 : i32, i32
  }
  func.func @transform_3(%arg0: i32) -> (i32, i32) {
    %c0_i32 = arith.constant 0 : i32
    %c0_i32_0 = arith.constant 0 : i32
    %c0_i32_1 = arith.constant 0 : i32
    return %c0_i32, %c0_i32_0 : i32, i32
  }
  func.func @transform_4(%arg0: i32) -> (i32, i32) {
    %c0_i32 = arith.constant 0 : i32
    %c0_i32_0 = arith.constant 0 : i32
    %c0_i32_1 = arith.constant 0 : i32
    return %c0_i32, %c0_i32_0 : i32, i32
  }
  func.func @transform_5(%arg0: i32) -> (i32, i32) {
    %c0_i32 = arith.constant 0 : i32
    %c0_i32_0 = arith.constant 0 : i32
    %c0_i32_1 = arith.constant 0 : i32
    return %c0_i32, %c0_i32_0 : i32, i32
  }
  func.func @transform_6(%arg0: i32) -> (i32, i32) {
    %c0_i32 = arith.constant 0 : i32
    %c0_i32_0 = arith.constant 0 : i32
    %c0_i32_1 = arith.constant 0 : i32
    return %c0_i32, %c0_i32_0 : i32, i32
  }
  func.func @transform_7(%arg0: i32) -> (i32, i32) {
    %c0_i32 = arith.constant 0 : i32
    %c0_i32_0 = arith.constant 0 : i32
    return %arg0, %c0_i32 : i32, i32
  }
}

</mosaic_0001>

<llo_original>
// kernel: snn_forward.1
$region0: #{snn_forward.1}
  #allocation0 [shape = 'u32[]', space=smem, size = 0x4, offset = 0x4, fixed_abs, tag = 'smem constant byte address 0x4 - core index']
  #allocation1 [shape = 'u32[144,128]{1,0:T(1,128)}', space=vmem, size = 0x12000, scoped, tag = 'internal scratch']
  #allocation2 [shape = 'f32[1,1]{1,0:T(1,128)S(1)}', space=vmem, size = 0x200, scoped, tag = 'scoped memory for snn_forward.1']
  %s0 = inlined_call_operand.vmem [shape: f32[16,256], index: 0, kind: input, shape index: {}]
  %s1 = inlined_call_operand.vmem [shape: f32[16,256], index: 1, kind: input, shape index: {}]
  %s2 = inlined_call_operand.vmem [shape: f32[256,128], index: 2, kind: input, shape index: {}]
  %s3 = inlined_call_operand.vmem [shape: f32[1,128], index: 3, kind: input, shape index: {}]
  %s4 = inlined_call_operand.vmem [shape: f32[128,1], index: 4, kind: input, shape index: {}]
  %s5 = inlined_call_operand.vmem [shape: f32[128,1], index: 5, kind: input, shape index: {}]
  %s6 = inlined_call_operand.<no memory space> [shape: f32[1,1], index: 6, kind: input, shape index: {}]
  %s7 = inlined_call_operand.vmem [shape: f32[16,1], index: 7, kind: output, shape index: {}]
  %s8 = sld [smem:[#allocation0]]
  $region72: #{snn_forward.1} parent=0
    _
  %s10 = ssub.s32 1, %s8
  %s11 = scalar_select 0, %s10, %s8
  %v12 = vstv %s6
  %13 = vst [vmem:[#allocation2] sm:$0x1] %v12
  $region1: #{snn_forward.1} parent=0
    #allocation3 [shape = 'u8[131072]{0}', space=vmem, size = 0x20000, scoped, tag = 'output window, operand 0, single buffered']
    // Predicated region
    $region2: #{snn_forward.1} parent=1 // pred_check
      _
    $region3: #{snn_forward.1} parent=1 // pred_check_branch
      %15 = sbr.rel (0) target = $region5
    $region4: #{snn_forward.1} parent=1 // pred_region
      _
    $region5: #{snn_forward.1} parent=1 // pred_fallthru
      _
    // Predicated region
    $region6: #{snn_forward.1} parent=1 // pred_check
      _
    $region7: #{snn_forward.1} parent=1 // pred_check_branch
      %17 = sbr.rel (0) target = $region9
    $region8: #{snn_forward.1} parent=1 // pred_region
      _
    $region9: #{snn_forward.1} parent=1 // pred_fallthru
      _
    // Predicated region
    $region10: #{snn_forward.1} parent=1 // pred_check
      _
    $region11: #{snn_forward.1} parent=1 // pred_check_branch
      %19 = sbr.rel (0) target = $region13
    $region12: #{snn_forward.1} parent=1 // pred_region
      _
    $region13: #{snn_forward.1} parent=1 // pred_fallthru
      _
    // Predicated region
    $region14: #{snn_forward.1} parent=1 // pred_check
      _
    $region15: #{snn_forward.1} parent=1 // pred_check_branch
      %21 = sbr.rel (0) target = $region17
    $region16: #{snn_forward.1} parent=1 // pred_region
      _
    $region17: #{snn_forward.1} parent=1 // pred_fallthru
      _
    // Predicated region
    $region18: #{snn_forward.1} parent=1 // pred_check
      _
    $region19: #{snn_forward.1} parent=1 // pred_check_branch
      %23 = sbr.rel (0) target = $region21
    $region20: #{snn_forward.1} parent=1 // pred_region
      _
    $region21: #{snn_forward.1} parent=1 // pred_fallthru
      _
    // Predicated region
    $region22: #{snn_forward.1} parent=1 // pred_check
      _
    $region23: #{snn_forward.1} parent=1 // pred_check_branch
      %25 = sbr.rel (0) target = $region25
    $region24: #{snn_forward.1} parent=1 // pred_region
      _
    $region25: #{snn_forward.1} parent=1 // pred_fallthru
      _
    // Predicated region
    $region26: #{snn_forward.1} parent=1 // pred_check
      _
    $region27: #{snn_forward.1} parent=1 // pred_check_branch
      %27 = sbr.rel (0) target = $region29
    $region28: #{snn_forward.1} parent=1 // pred_region
      _
    $region29: #{snn_forward.1} parent=1 // pred_fallthru
      _
    %v28 = vld [vmem:[%s0] sm:$0xff]
    %v29 = vld [vmem:[%s0 + $0x8] sm:$0xff]
    %v30 = vld [vmem:[%s0 + $0x10] sm:$0xff]
    %v31 = vld [vmem:[%s0 + $0x18] sm:$0xff]
    %v32 = vld [vmem:[%s0 + $0x20] sm:$0xff]
    %v33 = vld [vmem:[%s0 + $0x28] sm:$0xff]
    %v34 = vld [vmem:[%s0 + $0x30] sm:$0xff]
    %v35 = vld [vmem:[%s0 + $0x38] sm:$0xff]
    %v36 = vld [vmem:[%s0 + $0x40] sm:$0xff]
    %v37 = vld [vmem:[%s0 + $0x48] sm:$0xff]
    %v38 = vld [vmem:[%s0 + $0x50] sm:$0xff]
    %v39 = vld [vmem:[%s0 + $0x58] sm:$0xff]
    %v40 = vld [vmem:[%s0 + $0x60] sm:$0xff]
    %v41 = vld [vmem:[%s0 + $0x68] sm:$0xff]
    %v42 = vld [vmem:[%s0 + $0x70] sm:$0xff]
    %v43 = vld [vmem:[%s0 + $0x78] sm:$0xff]
    %v44 = vld [vmem:[%s0 + $0x80] sm:$0xff]
    %v45 = vld [vmem:[%s0 + $0x88] sm:$0xff]
    %v46 = vld [vmem:[%s0 + $0x90] sm:$0xff]
    %v47 = vld [vmem:[%s0 + $0x98] sm:$0xff]
    %v48 = vld [vmem:[%s0 + $0xa0] sm:$0xff]
    %v49 = vld [vmem:[%s0 + $0xa8] sm:$0xff]
    %v50 = vld [vmem:[%s0 + $0xb0] sm:$0xff]
    %v51 = vld [vmem:[%s0 + $0xb8] sm:$0xff]
    %v52 = vld [vmem:[%s0 + $0xc0] sm:$0xff]
    %v53 = vld [vmem:[%s0 + $0xc8] sm:$0xff]
    %v54 = vld [vmem:[%s0 + $0xd0] sm:$0xff]
    %v55 = vld [vmem:[%s0 + $0xd8] sm:$0xff]
    %v56 = vld [vmem:[%s0 + $0xe0] sm:$0xff]
    %v57 = vld [vmem:[%s0 + $0xe8] sm:$0xff]
    %v58 = vld [vmem:[%s0 + $0xf0] sm:$0xff]
    %v59 = vld [vmem:[%s0 + $0xf8] sm:$0xff]
    %v60 = vld [vmem:[%s0 + $0x100] sm:$0xff]
    %v61 = vld [vmem:[%s0 + $0x108] sm:$0xff]
    %v62 = vld [vmem:[%s0 + $0x110] sm:$0xff]
    %v63 = vld [vmem:[%s0 + $0x118] sm:$0xff]
    %v64 = vld [vmem:[%s0 + $0x120] sm:$0xff]
    %v65 = vld [vmem:[%s0 + $0x128] sm:$0xff]
    %v66 = vld [vmem:[%s0 + $0x130] sm:$0xff]
    %v67 = vld [vmem:[%s0 + $0x138] sm:$0xff]
    %v68 = vld [vmem:[%s0 + $0x140] sm:$0xff]
    %v69 = vld [vmem:[%s0 + $0x148] sm:$0xff]
    %v70 = vld [vmem:[%s0 + $0x150] sm:$0xff]
    %v71 = vld [vmem:[%s0 + $0x158] sm:$0xff]
    %v72 = vld [vmem:[%s0 + $0x160] sm:$0xff]
    %v73 = vld [vmem:[%s0 + $0x168] sm:$0xff]
    %v74 = vld [vmem:[%s0 + $0x170] sm:$0xff]
    %v75 = vld [vmem:[%s0 + $0x178] sm:$0xff]
    %v76 = vld [vmem:[%s0 + $0x180] sm:$0xff]
    %v77 = vld [vmem:[%s0 + $0x188] sm:$0xff]
    %v78 = vld [vmem:[%s0 + $0x190] sm:$0xff]
    %v79 = vld [vmem:[%s0 + $0x198] sm:$0xff]
    %v80 = vld [vmem:[%s0 + $0x1a0] sm:$0xff]
    %v81 = vld [vmem:[%s0 + $0x1a8] sm:$0xff]
    %v82 = vld [vmem:[%s0 + $0x1b0] sm:$0xff]
    %v83 = vld [vmem:[%s0 + $0x1b8] sm:$0xff]
    %v84 = vld [vmem:[%s0 + $0x1c0] sm:$0xff]
    %v85 = vld [vmem:[%s0 + $0x1c8] sm:$0xff]
    %v86 = vld [vmem:[%s0 + $0x1d0] sm:$0xff]
    %v87 = vld [vmem:[%s0 + $0x1d8] sm:$0xff]
    %v88 = vld [vmem:[%s0 + $0x1e0] sm:$0xff]
    %v89 = vld [vmem:[%s0 + $0x1e8] sm:$0xff]
    %v90 = vld [vmem:[%s0 + $0x1f0] sm:$0xff]
    %v91 = vld [vmem:[%s0 + $0x1f8] sm:$0xff]
    %v92 = vld [vmem:[%s2] sm:$0xff]
    %v93 = vld [vmem:[%s2 + $0x8] sm:$0xff]
    %v94 = vld [vmem:[%s2 + $0x10] sm:$0xff]
    %v95 = vld [vmem:[%s2 + $0x18] sm:$0xff]
    %v96 = vld [vmem:[%s2 + $0x20] sm:$0xff]
    %v97 = vld [vmem:[%s2 + $0x28] sm:$0xff]
    %v98 = vld [vmem:[%s2 + $0x30] sm:$0xff]
    %v99 = vld [vmem:[%s2 + $0x38] sm:$0xff]
    %v100 = vld [vmem:[%s2 + $0x40] sm:$0xff]
    %v101 = vld [vmem:[%s2 + $0x48] sm:$0xff]
    %v102 = vld [vmem:[%s2 + $0x50] sm:$0xff]
    %v103 = vld [vmem:[%s2 + $0x58] sm:$0xff]
    %v104 = vld [vmem:[%s2 + $0x60] sm:$0xff]
    %v105 = vld [vmem:[%s2 + $0x68] sm:$0xff]
    %v106 = vld [vmem:[%s2 + $0x70] sm:$0xff]
    %v107 = vld [vmem:[%s2 + $0x78] sm:$0xff]
    %v108 = vld [vmem:[%s2 + $0x80] sm:$0xff]
    %v109 = vld [vmem:[%s2 + $0x88] sm:$0xff]
    %v110 = vld [vmem:[%s2 + $0x90] sm:$0xff]
    %v111 = vld [vmem:[%s2 + $0x98] sm:$0xff]
    %v112 = vld [vmem:[%s2 + $0xa0] sm:$0xff]
    %v113 = vld [vmem:[%s2 + $0xa8] sm:$0xff]
    %v114 = vld [vmem:[%s2 + $0xb0] sm:$0xff]
    %v115 = vld [vmem:[%s2 + $0xb8] sm:$0xff]
    %v116 = vld [vmem:[%s2 + $0xc0] sm:$0xff]
    %v117 = vld [vmem:[%s2 + $0xc8] sm:$0xff]
    %v118 = vld [vmem:[%s2 + $0xd0] sm:$0xff]
    %v119 = vld [vmem:[%s2 + $0xd8] sm:$0xff]
    %v120 = vld [vmem:[%s2 + $0xe0] sm:$0xff]
    %v121 = vld [vmem:[%s2 + $0xe8] sm:$0xff]
    %v122 = vld [vmem:[%s2 + $0xf0] sm:$0xff]
    %v123 = vld [vmem:[%s2 + $0xf8] sm:$0xff]
    %v124 = vld [vmem:[%s3] sm:$0x1]
    %v126 = vlaneseq
    %v127 = vshrl.u32 %v126, 7
    %v128 = vsub.s32 0, %v127
    %v129 = vrot.slane %v124, %v128
    %131 = vmatprep.subr.mxu0 0.0
    %132 = vmatpush1.msra.mxu0 %v107
    %133 = vmatprep.subr.mxu0 0.0
    %134 = vmatpush1.msra.mxu0 %v106
    %135 = vmatprep.subr.mxu0 0.0
    %136 = vmatpush1.msra.mxu0 %v105
    %137 = vmatprep.subr.mxu0 0.0
    %138 = vmatpush1.msra.mxu0 %v104
    %139 = vmatprep.subr.mxu0 0.0
    %140 = vmatpush1.msra.mxu0 %v103
    %141 = vmatprep.subr.mxu0 0.0
    %142 = vmatpush1.msra.mxu0 %v102
    %143 = vmatprep.subr.mxu0 0.0
    %144 = vmatpush1.msra.mxu0 %v101
    %145 = vmatprep.subr.mxu0 0.0
    %146 = vmatpush1.msra.mxu0 %v100
    %147 = vmatprep.subr.mxu0 0.0
    %148 = vmatpush1.msra.mxu0 %v99
    %149 = vmatprep.subr.mxu0 0.0
    %150 = vmatpush1.msra.mxu0 %v98
    %151 = vmatprep.subr.mxu0 0.0
    %152 = vmatpush1.msra.mxu0 %v97
    %153 = vmatprep.subr.mxu0 0.0
    %154 = vmatpush1.msra.mxu0 %v96
    %155 = vmatprep.subr.mxu0 0.0
    %156 = vmatpush1.msra.mxu0 %v95
    %157 = vmatprep.subr.mxu0 0.0
    %158 = vmatpush1.msra.mxu0 %v94
    %159 = vmatprep.subr.mxu0 0.0
    %160 = vmatpush1.msra.mxu0 %v93
    %161 = vmatprep.subr.mxu0 0.0
    %162 = vmatpush1.msra.mxu0 %v92
    %163 = vmatprep.subr.mxu0 0.0
    %164 = vmatpush2.msra.mxu0 %v123
    %165 = vmatprep.subr.mxu0 0.0
    %166 = vmatpush2.msra.mxu0 %v122
    %167 = vmatprep.subr.mxu0 0.0
    %168 = vmatpush2.msra.mxu0 %v121
    %169 = vmatprep.subr.mxu0 0.0
    %170 = vmatpush2.msra.mxu0 %v120
    %171 = vmatprep.subr.mxu0 0.0
    %172 = vmatpush2.msra.mxu0 %v119
    %173 = vmatprep.subr.mxu0 0.0
    %174 = vmatpush2.msra.mxu0 %v118
    %175 = vmatprep.subr.mxu0 0.0
    %176 = vmatpush2.msra.mxu0 %v117
    %177 = vmatprep.subr.mxu0 0.0
    %178 = vmatpush2.msra.mxu0 %v116
    %179 = vmatprep.subr.mxu0 0.0
    %180 = vmatpush2.msra.mxu0 %v115
    %181 = vmatprep.subr.mxu0 0.0
    %182 = vmatpush2.msra.mxu0 %v114
    %183 = vmatprep.subr.mxu0 0.0
    %184 = vmatpush2.msra.mxu0 %v113
    %185 = vmatprep.subr.mxu0 0.0
    %186 = vmatpush2.msra.mxu0 %v112
    %187 = vmatprep.subr.mxu0 0.0
    %188 = vmatpush2.msra.mxu0 %v111
    %189 = vmatprep.subr.mxu0 0.0
    %190 = vmatpush2.msra.mxu0 %v110
    %191 = vmatprep.subr.mxu0 0.0
    %192 = vmatpush2.msra.mxu0 %v109
    %193 = vmatprep.subr.mxu0 0.0
    %194 = vmatpush2.msra.mxu0 %v108
    %195 = vmatprep.mubr.f32.mxu0 %v29
    %196 = vmatmul.mubr.f32.gmra.mxu0 %v28
    %v197 = vpop.f32.mrf.mxu0
    %v198 = vadd.f32 %v129, %v197
    %v199 = vpop.f32.mrf.mxu0
    %200 = vmatprep.mubr.f32.mxu0 %v31
    %201 = vmatmul.mubr.f32.gmra.mxu0 %v30
    %v202 = vpop.f32.mrf.mxu0
    %v203 = vadd.f32 %v129, %v202
    %v204 = vpop.f32.mrf.mxu0
    %205 = vmatprep.mubr.f32.mxu0 %v33
    %206 = vmatmul.mubr.f32.gmra.mxu0 %v32
    %v207 = vpop.f32.mrf.mxu0
    %v208 = vadd.f32 %v129, %v207
    %v209 = vpop.f32.mrf.mxu0
    %210 = vmatprep.mubr.f32.mxu0 %v35
    %211 = vmatmul.mubr.f32.gmra.mxu0 %v34
    %v212 = vpop.f32.mrf.mxu0
    %v213 = vadd.f32 %v129, %v212
    %v214 = vpop.f32.mrf.mxu0
    %215 = vmatprep.mubr.f32.mxu0 %v37
    %216 = vmatmul.mubr.f32.gmra.mxu0 %v36
    %v217 = vpop.f32.mrf.mxu0
    %v218 = vadd.f32 %v129, %v217
    %v219 = vpop.f32.mrf.mxu0
    %220 = vmatprep.mubr.f32.mxu0 %v39
    %221 = vmatmul.mubr.f32.gmra.mxu0 %v38
    %v222 = vpop.f32.mrf.mxu0
    %v223 = vadd.f32 %v129, %v222
    %v224 = vpop.f32.mrf.mxu0
    %225 = vmatprep.mubr.f32.mxu0 %v41
    %226 = vmatmul.mubr.f32.gmra.mxu0 %v40
    %v227 = vpop.f32.mrf.mxu0
    %v228 = vadd.f32 %v129, %v227
    %v229 = vpop.f32.mrf.mxu0
    %230 = vmatprep.mubr.f32.mxu0 %v43
    %231 = vmatmul.mubr.f32.gmra.mxu0 %v42
    %v232 = vpop.f32.mrf.mxu0
    %v233 = vadd.f32 %v129, %v232
    %v234 = vpop.f32.mrf.mxu0
    %235 = vmatprep.mubr.f32.mxu0 %v45
    %236 = vmatmul.mubr.f32.gmra.mxu0 %v44
    %v237 = vpop.f32.mrf.mxu0
    %v238 = vadd.f32 %v129, %v237
    %v239 = vpop.f32.mrf.mxu0
    %240 = vmatprep.mubr.f32.mxu0 %v47
    %241 = vmatmul.mubr.f32.gmra.mxu0 %v46
    %v242 = vpop.f32.mrf.mxu0
    %v243 = vadd.f32 %v129, %v242
    %v244 = vpop.f32.mrf.mxu0
    %245 = vmatprep.mubr.f32.mxu0 %v49
    %246 = vmatmul.mubr.f32.gmra.mxu0 %v48
    %v247 = vpop.f32.mrf.mxu0
    %v248 = vadd.f32 %v129, %v247
    %v249 = vpop.f32.mrf.mxu0
    %250 = vmatprep.mubr.f32.mxu0 %v51
    %251 = vmatmul.mubr.f32.gmra.mxu0 %v50
    %v252 = vpop.f32.mrf.mxu0
    %v253 = vadd.f32 %v129, %v252
    %v254 = vpop.f32.mrf.mxu0
    %255 = vmatprep.mubr.f32.mxu0 %v53
    %256 = vmatmul.mubr.f32.gmra.mxu0 %v52
    %v257 = vpop.f32.mrf.mxu0
    %v258 = vadd.f32 %v129, %v257
    %v259 = vpop.f32.mrf.mxu0
    %260 = vmatprep.mubr.f32.mxu0 %v55
    %261 = vmatmul.mubr.f32.gmra.mxu0 %v54
    %v262 = vpop.f32.mrf.mxu0
    %v263 = vadd.f32 %v129, %v262
    %v264 = vpop.f32.mrf.mxu0
    %265 = vmatprep.mubr.f32.mxu0 %v57
    %266 = vmatmul.mubr.f32.gmra.mxu0 %v56
    %v267 = vpop.f32.mrf.mxu0
    %v268 = vadd.f32 %v129, %v267
    %v269 = vpop.f32.mrf.mxu0
    %270 = vmatprep.mubr.f32.mxu0 %v59
    %271 = vmatmul.mubr.f32.gmra.mxu0 %v58
    %v272 = vpop.f32.mrf.mxu0
    %v273 = vadd.f32 %v129, %v272
    %v274 = vpop.f32.mrf.mxu0
    %275 = vmatprep.mubr.f32.mxu0 %v61
    %276 = vmatmul.mubr.f32.gmra.mxu0 %v60
    %v277 = vpop.f32.mrf.mxu0
    %v278 = vadd.f32 %v129, %v277
    %v279 = vpop.f32.mrf.mxu0
    %280 = vmatprep.mubr.f32.mxu0 %v63
    %281 = vmatmul.mubr.f32.gmra.mxu0 %v62
    %v282 = vpop.f32.mrf.mxu0
    %v283 = vadd.f32 %v129, %v282
    %v284 = vpop.f32.mrf.mxu0
    %285 = vmatprep.mubr.f32.mxu0 %v65
    %286 = vmatmul.mubr.f32.gmra.mxu0 %v64
    %v287 = vpop.f32.mrf.mxu0
    %v288 = vadd.f32 %v129, %v287
    %v289 = vpop.f32.mrf.mxu0
    %290 = vmatprep.mubr.f32.mxu0 %v67
    %291 = vmatmul.mubr.f32.gmra.mxu0 %v66
    %v292 = vpop.f32.mrf.mxu0
    %v293 = vadd.f32 %v129, %v292
    %v294 = vpop.f32.mrf.mxu0
    %295 = vmatprep.mubr.f32.mxu0 %v69
    %296 = vmatmul.mubr.f32.gmra.mxu0 %v68
    %v297 = vpop.f32.mrf.mxu0
    %v298 = vadd.f32 %v129, %v297
    %v299 = vpop.f32.mrf.mxu0
    %300 = vmatprep.mubr.f32.mxu0 %v71
    %301 = vmatmul.mubr.f32.gmra.mxu0 %v70
    %v302 = vpop.f32.mrf.mxu0
    %v303 = vadd.f32 %v129, %v302
    %v304 = vpop.f32.mrf.mxu0
    %305 = vmatprep.mubr.f32.mxu0 %v73
    %306 = vmatmul.mubr.f32.gmra.mxu0 %v72
    %v307 = vpop.f32.mrf.mxu0
    %v308 = vadd.f32 %v129, %v307
    %v309 = vpop.f32.mrf.mxu0
    %310 = vmatprep.mubr.f32.mxu0 %v75
    %311 = vmatmul.mubr.f32.gmra.mxu0 %v74
    %v312 = vpop.f32.mrf.mxu0
    %v313 = vadd.f32 %v129, %v312
    %v314 = vpop.f32.mrf.mxu0
    %315 = vmatprep.mubr.f32.mxu0 %v77
    %316 = vmatmul.mubr.f32.gmra.mxu0 %v76
    %v317 = vpop.f32.mrf.mxu0
    %v318 = vadd.f32 %v129, %v317
    %v319 = vpop.f32.mrf.mxu0
    %320 = vmatprep.mubr.f32.mxu0 %v79
    %321 = vmatmul.mubr.f32.gmra.mxu0 %v78
    %v322 = vpop.f32.mrf.mxu0
    %v323 = vadd.f32 %v129, %v322
    %v324 = vpop.f32.mrf.mxu0
    %325 = vmatprep.mubr.f32.mxu0 %v81
    %326 = vmatmul.mubr.f32.gmra.mxu0 %v80
    %v327 = vpop.f32.mrf.mxu0
    %v328 = vadd.f32 %v129, %v327
    %v329 = vpop.f32.mrf.mxu0
    %330 = vmatprep.mubr.f32.mxu0 %v83
    %331 = vmatmul.mubr.f32.gmra.mxu0 %v82
    %v332 = vpop.f32.mrf.mxu0
    %v333 = vadd.f32 %v129, %v332
    %v334 = vpop.f32.mrf.mxu0
    %335 = vmatprep.mubr.f32.mxu0 %v85
    %336 = vmatmul.mubr.f32.gmra.mxu0 %v84
    %v337 = vpop.f32.mrf.mxu0
    %v338 = vadd.f32 %v129, %v337
    %v339 = vpop.f32.mrf.mxu0
    %340 = vmatprep.mubr.f32.mxu0 %v87
    %341 = vmatmul.mubr.f32.gmra.mxu0 %v86
    %v342 = vpop.f32.mrf.mxu0
    %v343 = vadd.f32 %v129, %v342
    %v344 = vpop.f32.mrf.mxu0
    %345 = vmatprep.mubr.f32.mxu0 %v89
    %346 = vmatmul.mubr.f32.gmra.mxu0 %v88
    %v347 = vpop.f32.mrf.mxu0
    %v348 = vadd.f32 %v129, %v347
    %v349 = vpop.f32.mrf.mxu0
    %350 = vmatprep.mubr.f32.mxu0 %v91
    %351 = vmatmul.mubr.f32.gmra.mxu0 %v90
    %v352 = vpop.f32.mrf.mxu0
    %v353 = vadd.f32 %v129, %v352
    %v354 = vpop.f32.mrf.mxu0
    %355 = vdwg.mxu0
    %v356 = vmax.f32 %v198, 0.0
    %v357 = vmax.f32 %v203, 0.0
    %v358 = vmax.f32 %v208, 0.0
    %v359 = vmax.f32 %v213, 0.0
    %v360 = vmax.f32 %v218, 0.0
    %v361 = vmax.f32 %v223, 0.0
    %v362 = vmax.f32 %v228, 0.0
    %v363 = vmax.f32 %v233, 0.0
    %v364 = vmax.f32 %v238, 0.0
    %v365 = vmax.f32 %v243, 0.0
    %v366 = vmax.f32 %v248, 0.0
    %v367 = vmax.f32 %v253, 0.0
    %v368 = vmax.f32 %v258, 0.0
    %v369 = vmax.f32 %v263, 0.0
    %v370 = vmax.f32 %v268, 0.0
    %v371 = vmax.f32 %v273, 0.0
    %v372 = vmax.f32 %v278, 0.0
    %v373 = vmax.f32 %v283, 0.0
    %v374 = vmax.f32 %v288, 0.0
    %v375 = vmax.f32 %v293, 0.0
    %v376 = vmax.f32 %v298, 0.0
    %v377 = vmax.f32 %v303, 0.0
    %v378 = vmax.f32 %v308, 0.0
    %v379 = vmax.f32 %v313, 0.0
    %v380 = vmax.f32 %v318, 0.0
    %v381 = vmax.f32 %v323, 0.0
    %v382 = vmax.f32 %v328, 0.0
    %v383 = vmax.f32 %v333, 0.0
    %v384 = vmax.f32 %v338, 0.0
    %v385 = vmax.f32 %v343, 0.0
    %v386 = vmax.f32 %v348, 0.0
    %v387 = vmax.f32 %v353, 0.0
    %v388 = vld [vmem:[%s1] sm:$0xff]
    %v389 = vld [vmem:[%s1 + $0x8] sm:$0xff]
    %v390 = vld [vmem:[%s1 + $0x10] sm:$0xff]
    %v391 = vld [vmem:[%s1 + $0x18] sm:$0xff]
    %v392 = vld [vmem:[%s1 + $0x20] sm:$0xff]
    %v393 = vld [vmem:[%s1 + $0x28] sm:$0xff]
    %v394 = vld [vmem:[%s1 + $0x30] sm:$0xff]
    %v395 = vld [vmem:[%s1 + $0x38] sm:$0xff]
    %v396 = vld [vmem:[%s1 + $0x40] sm:$0xff]
    %v397 = vld [vmem:[%s1 + $0x48] sm:$0xff]
    %v398 = vld [vmem:[%s1 + $0x50] sm:$0xff]
    %v399 = vld [vmem:[%s1 + $0x58] sm:$0xff]
    %v400 = vld [vmem:[%s1 + $0x60] sm:$0xff]
    %v401 = vld [vmem:[%s1 + $0x68] sm:$0xff]
    %v402 = vld [vmem:[%s1 + $0x70] sm:$0xff]
    %v403 = vld [vmem:[%s1 + $0x78] sm:$0xff]
    %v404 = vld [vmem:[%s1 + $0x80] sm:$0xff]
    %v405 = vld [vmem:[%s1 + $0x88] sm:$0xff]
    %v406 = vld [vmem:[%s1 + $0x90] sm:$0xff]
    %v407 = vld [vmem:[%s1 + $0x98] sm:$0xff]
    %v408 = vld [vmem:[%s1 + $0xa0] sm:$0xff]
    %v409 = vld [vmem:[%s1 + $0xa8] sm:$0xff]
    %v410 = vld [vmem:[%s1 + $0xb0] sm:$0xff]
    %v411 = vld [vmem:[%s1 + $0xb8] sm:$0xff]
    %v412 = vld [vmem:[%s1 + $0xc0] sm:$0xff]
    %v413 = vld [vmem:[%s1 + $0xc8] sm:$0xff]
    %v414 = vld [vmem:[%s1 + $0xd0] sm:$0xff]
    %v415 = vld [vmem:[%s1 + $0xd8] sm:$0xff]
    %v416 = vld [vmem:[%s1 + $0xe0] sm:$0xff]
    %v417 = vld [vmem:[%s1 + $0xe8] sm:$0xff]
    %v418 = vld [vmem:[%s1 + $0xf0] sm:$0xff]
    %v419 = vld [vmem:[%s1 + $0xf8] sm:$0xff]
    %v420 = vld [vmem:[%s1 + $0x100] sm:$0xff]
    %v421 = vld [vmem:[%s1 + $0x108] sm:$0xff]
    %v422 = vld [vmem:[%s1 + $0x110] sm:$0xff]
    %v423 = vld [vmem:[%s1 + $0x118] sm:$0xff]
    %v424 = vld [vmem:[%s1 + $0x120] sm:$0xff]
    %v425 = vld [vmem:[%s1 + $0x128] sm:$0xff]
    %v426 = vld [vmem:[%s1 + $0x130] sm:$0xff]
    %v427 = vld [vmem:[%s1 + $0x138] sm:$0xff]
    %v428 = vld [vmem:[%s1 + $0x140] sm:$0xff]
    %v429 = vld [vmem:[%s1 + $0x148] sm:$0xff]
    %v430 = vld [vmem:[%s1 + $0x150] sm:$0xff]
    %v431 = vld [vmem:[%s1 + $0x158] sm:$0xff]
    %v432 = vld [vmem:[%s1 + $0x160] sm:$0xff]
    %v433 = vld [vmem:[%s1 + $0x168] sm:$0xff]
    %v434 = vld [vmem:[%s1 + $0x170] sm:$0xff]
    %v435 = vld [vmem:[%s1 + $0x178] sm:$0xff]
    %v436 = vld [vmem:[%s1 + $0x180] sm:$0xff]
    %v437 = vld [vmem:[%s1 + $0x188] sm:$0xff]
    %v438 = vld [vmem:[%s1 + $0x190] sm:$0xff]
    %v439 = vld [vmem:[%s1 + $0x198] sm:$0xff]
    %v440 = vld [vmem:[%s1 + $0x1a0] sm:$0xff]
    %v441 = vld [vmem:[%s1 + $0x1a8] sm:$0xff]
    %v442 = vld [vmem:[%s1 + $0x1b0] sm:$0xff]
    %v443 = vld [vmem:[%s1 + $0x1b8] sm:$0xff]
    %v444 = vld [vmem:[%s1 + $0x1c0] sm:$0xff]
    %v445 = vld [vmem:[%s1 + $0x1c8] sm:$0xff]
    %v446 = vld [vmem:[%s1 + $0x1d0] sm:$0xff]
    %v447 = vld [vmem:[%s1 + $0x1d8] sm:$0xff]
    %v448 = vld [vmem:[%s1 + $0x1e0] sm:$0xff]
    %v449 = vld [vmem:[%s1 + $0x1e8] sm:$0xff]
    %v450 = vld [vmem:[%s1 + $0x1f0] sm:$0xff]
    %v451 = vld [vmem:[%s1 + $0x1f8] sm:$0xff]
    %452 = vmatprep.subr.mxu0 0.0
    %453 = vmatpush1.msra.mxu0 %v107
    %454 = vmatprep.subr.mxu0 0.0
    %455 = vmatpush1.msra.mxu0 %v106
    %456 = vmatprep.subr.mxu0 0.0
    %457 = vmatpush1.msra.mxu0 %v105
    %458 = vmatprep.subr.mxu0 0.0
    %459 = vmatpush1.msra.mxu0 %v104
    %460 = vmatprep.subr.mxu0 0.0
    %461 = vmatpush1.msra.mxu0 %v103
    %462 = vmatprep.subr.mxu0 0.0
    %463 = vmatpush1.msra.mxu0 %v102
    %464 = vmatprep.subr.mxu0 0.0
    %465 = vmatpush1.msra.mxu0 %v101
    %466 = vmatprep.subr.mxu0 0.0
    %467 = vmatpush1.msra.mxu0 %v100
    %468 = vmatprep.subr.mxu0 0.0
    %469 = vmatpush1.msra.mxu0 %v99
    %470 = vmatprep.subr.mxu0 0.0
    %471 = vmatpush1.msra.mxu0 %v98
    %472 = vmatprep.subr.mxu0 0.0
    %473 = vmatpush1.msra.mxu0 %v97
    %474 = vmatprep.subr.mxu0 0.0
    %475 = vmatpush1.msra.mxu0 %v96
    %476 = vmatprep.subr.mxu0 0.0
    %477 = vmatpush1.msra.mxu0 %v95
    %478 = vmatprep.subr.mxu0 0.0
    %479 = vmatpush1.msra.mxu0 %v94
    %480 = vmatprep.subr.mxu0 0.0
    %481 = vmatpush1.msra.mxu0 %v93
    %482 = vmatprep.subr.mxu0 0.0
    %483 = vmatpush1.msra.mxu0 %v92
    %484 = vmatprep.subr.mxu0 0.0
    %485 = vmatpush2.msra.mxu0 %v123
    %486 = vmatprep.subr.mxu0 0.0
    %487 = vmatpush2.msra.mxu0 %v122
    %488 = vmatprep.subr.mxu0 0.0
    %489 = vmatpush2.msra.mxu0 %v121
    %490 = vmatprep.subr.mxu0 0.0
    %491 = vmatpush2.msra.mxu0 %v120
    %492 = vmatprep.subr.mxu0 0.0
    %493 = vmatpush2.msra.mxu0 %v119
    %494 = vmatprep.subr.mxu0 0.0
    %495 = vmatpush2.msra.mxu0 %v118
    %496 = vmatprep.subr.mxu0 0.0
    %497 = vmatpush2.msra.mxu0 %v117
    %498 = vmatprep.subr.mxu0 0.0
    %499 = vmatpush2.msra.mxu0 %v116
    %500 = vmatprep.subr.mxu0 0.0
    %501 = vmatpush2.msra.mxu0 %v115
    %502 = vmatprep.subr.mxu0 0.0
    %503 = vmatpush2.msra.mxu0 %v114
    %504 = vmatprep.subr.mxu0 0.0
    %505 = vmatpush2.msra.mxu0 %v113
    %506 = vmatprep.subr.mxu0 0.0
    %507 = vmatpush2.msra.mxu0 %v112
    %508 = vmatprep.subr.mxu0 0.0
    %509 = vmatpush2.msra.mxu0 %v111
    %510 = vmatprep.subr.mxu0 0.0
    %511 = vmatpush2.msra.mxu0 %v110
    %512 = vmatprep.subr.mxu0 0.0
    %513 = vmatpush2.msra.mxu0 %v109
    %514 = vmatprep.subr.mxu0 0.0
    %515 = vmatpush2.msra.mxu0 %v108
    %516 = vmatprep.mubr.f32.mxu0 %v389
    %517 = vmatmul.mubr.f32.gmra.mxu0 %v388
    %v518 = vpop.f32.mrf.mxu0
    %v519 = vadd.f32 %v129, %v518
    %v520 = vpop.f32.mrf.mxu0
    %521 = vmatprep.mubr.f32.mxu0 %v391
    %522 = vmatmul.mubr.f32.gmra.mxu0 %v390
    %v523 = vpop.f32.mrf.mxu0
    %v524 = vadd.f32 %v129, %v523
    %v525 = vpop.f32.mrf.mxu0
    %526 = vmatprep.mubr.f32.mxu0 %v393
    %527 = vmatmul.mubr.f32.gmra.mxu0 %v392
    %v528 = vpop.f32.mrf.mxu0
    %v529 = vadd.f32 %v129, %v528
    %v530 = vpop.f32.mrf.mxu0
    %531 = vmatprep.mubr.f32.mxu0 %v395
    %532 = vmatmul.mubr.f32.gmra.mxu0 %v394
    %v533 = vpop.f32.mrf.mxu0
    %v534 = vadd.f32 %v129, %v533
    %v535 = vpop.f32.mrf.mxu0
    %536 = vmatprep.mubr.f32.mxu0 %v397
    %537 = vmatmul.mubr.f32.gmra.mxu0 %v396
    %v538 = vpop.f32.mrf.mxu0
    %v539 = vadd.f32 %v129, %v538
    %v540 = vpop.f32.mrf.mxu0
    %541 = vmatprep.mubr.f32.mxu0 %v399
    %542 = vmatmul.mubr.f32.gmra.mxu0 %v398
    %v543 = vpop.f32.mrf.mxu0
    %v544 = vadd.f32 %v129, %v543
    %v545 = vpop.f32.mrf.mxu0
    %546 = vmatprep.mubr.f32.mxu0 %v401
    %547 = vmatmul.mubr.f32.gmra.mxu0 %v400
    %v548 = vpop.f32.mrf.mxu0
    %v549 = vadd.f32 %v129, %v548
    %v550 = vpop.f32.mrf.mxu0
    %551 = vmatprep.mubr.f32.mxu0 %v403
    %552 = vmatmul.mubr.f32.gmra.mxu0 %v402
    %v553 = vpop.f32.mrf.mxu0
    %v554 = vadd.f32 %v129, %v553
    %v555 = vpop.f32.mrf.mxu0
    %556 = vmatprep.mubr.f32.mxu0 %v405
    %557 = vmatmul.mubr.f32.gmra.mxu0 %v404
    %v558 = vpop.f32.mrf.mxu0
    %v559 = vadd.f32 %v129, %v558
    %v560 = vpop.f32.mrf.mxu0
    %561 = vmatprep.mubr.f32.mxu0 %v407
    %562 = vmatmul.mubr.f32.gmra.mxu0 %v406
    %v563 = vpop.f32.mrf.mxu0
    %v564 = vadd.f32 %v129, %v563
    %v565 = vpop.f32.mrf.mxu0
    %566 = vmatprep.mubr.f32.mxu0 %v409
    %567 = vmatmul.mubr.f32.gmra.mxu0 %v408
    %v568 = vpop.f32.mrf.mxu0
    %v569 = vadd.f32 %v129, %v568
    %v570 = vpop.f32.mrf.mxu0
    %571 = vmatprep.mubr.f32.mxu0 %v411
    %572 = vmatmul.mubr.f32.gmra.mxu0 %v410
    %v573 = vpop.f32.mrf.mxu0
    %v574 = vadd.f32 %v129, %v573
    %v575 = vpop.f32.mrf.mxu0
    %576 = vmatprep.mubr.f32.mxu0 %v413
    %577 = vmatmul.mubr.f32.gmra.mxu0 %v412
    %v578 = vpop.f32.mrf.mxu0
    %v579 = vadd.f32 %v129, %v578
    %v580 = vpop.f32.mrf.mxu0
    %581 = vmatprep.mubr.f32.mxu0 %v415
    %582 = vmatmul.mubr.f32.gmra.mxu0 %v414
    %v583 = vpop.f32.mrf.mxu0
    %v584 = vadd.f32 %v129, %v583
    %v585 = vpop.f32.mrf.mxu0
    %586 = vmatprep.mubr.f32.mxu0 %v417
    %587 = vmatmul.mubr.f32.gmra.mxu0 %v416
    %v588 = vpop.f32.mrf.mxu0
    %v589 = vadd.f32 %v129, %v588
    %v590 = vpop.f32.mrf.mxu0
    %591 = vmatprep.mubr.f32.mxu0 %v419
    %592 = vmatmul.mubr.f32.gmra.mxu0 %v418
    %v593 = vpop.f32.mrf.mxu0
    %v594 = vadd.f32 %v129, %v593
    %v595 = vpop.f32.mrf.mxu0
    %596 = vmatprep.mubr.f32.mxu0 %v421
    %597 = vmatmul.mubr.f32.gmra.mxu0 %v420
    %v598 = vpop.f32.mrf.mxu0
    %v599 = vadd.f32 %v129, %v598
    %v600 = vpop.f32.mrf.mxu0
    %601 = vmatprep.mubr.f32.mxu0 %v423
    %602 = vmatmul.mubr.f32.gmra.mxu0 %v422
    %v603 = vpop.f32.mrf.mxu0
    %v604 = vadd.f32 %v129, %v603
    %v605 = vpop.f32.mrf.mxu0
    %606 = vmatprep.mubr.f32.mxu0 %v425
    %607 = vmatmul.mubr.f32.gmra.mxu0 %v424
    %v608 = vpop.f32.mrf.mxu0
    %v609 = vadd.f32 %v129, %v608
    %v610 = vpop.f32.mrf.mxu0
    %611 = vmatprep.mubr.f32.mxu0 %v427
    %612 = vmatmul.mubr.f32.gmra.mxu0 %v426
    %v613 = vpop.f32.mrf.mxu0
    %v614 = vadd.f32 %v129, %v613
    %v615 = vpop.f32.mrf.mxu0
    %616 = vmatprep.mubr.f32.mxu0 %v429
    %617 = vmatmul.mubr.f32.gmra.mxu0 %v428
    %v618 = vpop.f32.mrf.mxu0
    %v619 = vadd.f32 %v129, %v618
    %v620 = vpop.f32.mrf.mxu0
    %621 = vmatprep.mubr.f32.mxu0 %v431
    %622 = vmatmul.mubr.f32.gmra.mxu0 %v430
    %v623 = vpop.f32.mrf.mxu0
    %v624 = vadd.f32 %v129, %v623
    %v625 = vpop.f32.mrf.mxu0
    %626 = vmatprep.mubr.f32.mxu0 %v433
    %627 = vmatmul.mubr.f32.gmra.mxu0 %v432
    %v628 = vpop.f32.mrf.mxu0
    %v629 = vadd.f32 %v129, %v628
    %v630 = vpop.f32.mrf.mxu0
    %631 = vmatprep.mubr.f32.mxu0 %v435
    %632 = vmatmul.mubr.f32.gmra.mxu0 %v434
    %v633 = vpop.f32.mrf.mxu0
    %v634 = vadd.f32 %v129, %v633
    %v635 = vpop.f32.mrf.mxu0
    %636 = vmatprep.mubr.f32.mxu0 %v437
    %637 = vmatmul.mubr.f32.gmra.mxu0 %v436
    %v638 = vpop.f32.mrf.mxu0
    %v639 = vadd.f32 %v129, %v638
    %v640 = vpop.f32.mrf.mxu0
    %641 = vmatprep.mubr.f32.mxu0 %v439
    %642 = vmatmul.mubr.f32.gmra.mxu0 %v438
    %v643 = vpop.f32.mrf.mxu0
    %v644 = vadd.f32 %v129, %v643
    %v645 = vpop.f32.mrf.mxu0
    %646 = vmatprep.mubr.f32.mxu0 %v441
    %647 = vmatmul.mubr.f32.gmra.mxu0 %v440
    %v648 = vpop.f32.mrf.mxu0
    %v649 = vadd.f32 %v129, %v648
    %v650 = vpop.f32.mrf.mxu0
    %651 = vmatprep.mubr.f32.mxu0 %v443
    %652 = vmatmul.mubr.f32.gmra.mxu0 %v442
    %v653 = vpop.f32.mrf.mxu0
    %v654 = vadd.f32 %v129, %v653
    %v655 = vpop.f32.mrf.mxu0
    %656 = vmatprep.mubr.f32.mxu0 %v445
    %657 = vmatmul.mubr.f32.gmra.mxu0 %v444
    %v658 = vpop.f32.mrf.mxu0
    %v659 = vadd.f32 %v129, %v658
    %v660 = vpop.f32.mrf.mxu0
    %661 = vmatprep.mubr.f32.mxu0 %v447
    %662 = vmatmul.mubr.f32.gmra.mxu0 %v446
    %v663 = vpop.f32.mrf.mxu0
    %v664 = vadd.f32 %v129, %v663
    %v665 = vpop.f32.mrf.mxu0
    %666 = vmatprep.mubr.f32.mxu0 %v449
    %667 = vmatmul.mubr.f32.gmra.mxu0 %v448
    %v668 = vpop.f32.mrf.mxu0
    %v669 = vadd.f32 %v129, %v668
    %v670 = vpop.f32.mrf.mxu0
    %671 = vmatprep.mubr.f32.mxu0 %v451
    %672 = vmatmul.mubr.f32.gmra.mxu0 %v450
    %v673 = vpop.f32.mrf.mxu0
    %v674 = vadd.f32 %v129, %v673
    %v675 = vpop.f32.mrf.mxu0
    %676 = vdwg.mxu0
    %v677 = vmax.f32 %v519, 0.0
    %v678 = vmax.f32 %v524, 0.0
    %v679 = vmax.f32 %v529, 0.0
    %v680 = vmax.f32 %v534, 0.0
    %v681 = vmax.f32 %v539, 0.0
    %v682 = vmax.f32 %v544, 0.0
    %v683 = vmax.f32 %v549, 0.0
    %v684 = vmax.f32 %v554, 0.0
    %v685 = vmax.f32 %v559, 0.0
    %v686 = vmax.f32 %v564, 0.0
    %v687 = vmax.f32 %v569, 0.0
    %v688 = vmax.f32 %v574, 0.0
    %v689 = vmax.f32 %v579, 0.0
    %v690 = vmax.f32 %v584, 0.0
    %v691 = vmax.f32 %v589, 0.0
    %v692 = vmax.f32 %v594, 0.0
    %v693 = vmax.f32 %v599, 0.0
    %v694 = vmax.f32 %v604, 0.0
    %v695 = vmax.f32 %v609, 0.0
    %v696 = vmax.f32 %v614, 0.0
    %v697 = vmax.f32 %v619, 0.0
    %v698 = vmax.f32 %v624, 0.0
    %v699 = vmax.f32 %v629, 0.0
    %v700 = vmax.f32 %v634, 0.0
    %v701 = vmax.f32 %v639, 0.0
    %v702 = vmax.f32 %v644, 0.0
    %v703 = vmax.f32 %v649, 0.0
    %v704 = vmax.f32 %v654, 0.0
    %v705 = vmax.f32 %v659, 0.0
    %v706 = vmax.f32 %v664, 0.0
    %v707 = vmax.f32 %v669, 0.0
    %v708 = vmax.f32 %v674, 0.0
    %v709 = vld [vmem:[%s4] sm:$0xff]
    %v710 = vld [vmem:[%s4 + $0x8] sm:$0xff]
    %v711 = vld [vmem:[%s4 + $0x10] sm:$0xff]
    %v712 = vld [vmem:[%s4 + $0x18] sm:$0xff]
    %v713 = vld [vmem:[%s4 + $0x20] sm:$0xff]
    %v714 = vld [vmem:[%s4 + $0x28] sm:$0xff]
    %v715 = vld [vmem:[%s4 + $0x30] sm:$0xff]
    %v716 = vld [vmem:[%s4 + $0x38] sm:$0xff]
    %v717 = vld [vmem:[%s4 + $0x40] sm:$0xff]
    %v718 = vld [vmem:[%s4 + $0x48] sm:$0xff]
    %v719 = vld [vmem:[%s4 + $0x50] sm:$0xff]
    %v720 = vld [vmem:[%s4 + $0x58] sm:$0xff]
    %v721 = vld [vmem:[%s4 + $0x60] sm:$0xff]
    %v722 = vld [vmem:[%s4 + $0x68] sm:$0xff]
    %v723 = vld [vmem:[%s4 + $0x70] sm:$0xff]
    %v724 = vld [vmem:[%s4 + $0x78] sm:$0xff]
    %v725 = vld [vmem:[%s5] sm:$0xff]
    %v726 = vld [vmem:[%s5 + $0x8] sm:$0xff]
    %v727 = vld [vmem:[%s5 + $0x10] sm:$0xff]
    %v728 = vld [vmem:[%s5 + $0x18] sm:$0xff]
    %v729 = vld [vmem:[%s5 + $0x20] sm:$0xff]
    %v730 = vld [vmem:[%s5 + $0x28] sm:$0xff]
    %v731 = vld [vmem:[%s5 + $0x30] sm:$0xff]
    %v732 = vld [vmem:[%s5 + $0x38] sm:$0xff]
    %v733 = vld [vmem:[%s5 + $0x40] sm:$0xff]
    %v734 = vld [vmem:[%s5 + $0x48] sm:$0xff]
    %v735 = vld [vmem:[%s5 + $0x50] sm:$0xff]
    %v736 = vld [vmem:[%s5 + $0x58] sm:$0xff]
    %v737 = vld [vmem:[%s5 + $0x60] sm:$0xff]
    %v738 = vld [vmem:[%s5 + $0x68] sm:$0xff]
    %v739 = vld [vmem:[%s5 + $0x70] sm:$0xff]
    %v740 = vld [vmem:[%s5 + $0x78] sm:$0xff]
    %741 = vmatprep.subr.mxu0 0.0
    %742 = vmatpush1.msra.mxu0 %v740
    %743 = vmatprep.subr.mxu0 0.0
    %744 = vmatpush1.msra.mxu0 %v739
    %745 = vmatprep.subr.mxu0 0.0
    %746 = vmatpush1.msra.mxu0 %v738
    %747 = vmatprep.subr.mxu0 0.0
    %748 = vmatpush1.msra.mxu0 %v737
    %749 = vmatprep.subr.mxu0 0.0
    %750 = vmatpush1.msra.mxu0 %v736
    %751 = vmatprep.subr.mxu0 0.0
    %752 = vmatpush1.msra.mxu0 %v735
    %753 = vmatprep.subr.mxu0 0.0
    %754 = vmatpush1.msra.mxu0 %v734
    %755 = vmatprep.subr.mxu0 0.0
    %756 = vmatpush1.msra.mxu0 %v733
    %757 = vmatprep.subr.mxu0 0.0
    %758 = vmatpush1.msra.mxu0 %v732
    %759 = vmatprep.subr.mxu0 0.0
    %760 = vmatpush1.msra.mxu0 %v731
    %761 = vmatprep.subr.mxu0 0.0
    %762 = vmatpush1.msra.mxu0 %v730
    %763 = vmatprep.subr.mxu0 0.0
    %764 = vmatpush1.msra.mxu0 %v729
    %765 = vmatprep.subr.mxu0 0.0
    %766 = vmatpush1.msra.mxu0 %v728
    %767 = vmatprep.subr.mxu0 0.0
    %768 = vmatpush1.msra.mxu0 %v727
    %769 = vmatprep.subr.mxu0 0.0
    %770 = vmatpush1.msra.mxu0 %v726
    %771 = vmatprep.subr.mxu0 0.0
    %772 = vmatpush1.msra.mxu0 %v725
    %773 = vmatprep.subr.mxu0 0.0
    %774 = vmatpush2.msra.mxu0 0.0
    %775 = vmatprep.subr.mxu0 0.0
    %776 = vmatpush2.msra.mxu0 0.0
    %777 = vmatprep.subr.mxu0 0.0
    %778 = vmatpush2.msra.mxu0 0.0
    %779 = vmatprep.subr.mxu0 0.0
    %780 = vmatpush2.msra.mxu0 0.0
    %781 = vmatprep.subr.mxu0 0.0
    %782 = vmatpush2.msra.mxu0 0.0
    %783 = vmatprep.subr.mxu0 0.0
    %784 = vmatpush2.msra.mxu0 0.0
    %785 = vmatprep.subr.mxu0 0.0
    %786 = vmatpush2.msra.mxu0 0.0
    %787 = vmatprep.subr.mxu0 0.0
    %788 = vmatpush2.msra.mxu0 0.0
    %789 = vmatprep.subr.mxu0 0.0
    %790 = vmatpush2.msra.mxu0 0.0
    %791 = vmatprep.subr.mxu0 0.0
    %792 = vmatpush2.msra.mxu0 0.0
    %793 = vmatprep.subr.mxu0 0.0
    %794 = vmatpush2.msra.mxu0 0.0
    %795 = vmatprep.subr.mxu0 0.0
    %796 = vmatpush2.msra.mxu0 0.0
    %797 = vmatprep.subr.mxu0 0.0
    %798 = vmatpush2.msra.mxu0 0.0
    %799 = vmatprep.subr.mxu0 0.0
    %800 = vmatpush2.msra.mxu0 0.0
    %801 = vmatprep.subr.mxu0 0.0
    %802 = vmatpush2.msra.mxu0 0.0
    %803 = vmatprep.subr.mxu0 0.0
    %804 = vmatpush2.msra.mxu0 0.0
    %805 = vmatprep.mubr.f32.mxu0 0.0
    %806 = vmatmul.mubr.f32.gmra.mxu0 %v677
    %v807 = vpop.f32.mrf.mxu0
    %v808 = vadd.f32 0.0, %v807
    %v809 = vpop.f32.mrf.mxu0
    %810 = vmatprep.mubr.f32.mxu0 0.0
    %811 = vmatmul.mubr.f32.gmra.mxu0 %v678
    %v812 = vpop.f32.mrf.mxu0
    %v813 = vadd.f32 0.0, %v812
    %v814 = vpop.f32.mrf.mxu0
    %815 = vmatprep.mubr.f32.mxu0 0.0
    %816 = vmatmul.mubr.f32.gmra.mxu0 %v679
    %v817 = vpop.f32.mrf.mxu0
    %v818 = vadd.f32 0.0, %v817
    %v819 = vpop.f32.mrf.mxu0
    %820 = vmatprep.mubr.f32.mxu0 0.0
    %821 = vmatmul.mubr.f32.gmra.mxu0 %v680
    %v822 = vpop.f32.mrf.mxu0
    %v823 = vadd.f32 0.0, %v822
    %v824 = vpop.f32.mrf.mxu0
    %825 = vmatprep.mubr.f32.mxu0 0.0
    %826 = vmatmul.mubr.f32.gmra.mxu0 %v681
    %v827 = vpop.f32.mrf.mxu0
    %v828 = vadd.f32 0.0, %v827
    %v829 = vpop.f32.mrf.mxu0
    %830 = vmatprep.mubr.f32.mxu0 0.0
    %831 = vmatmul.mubr.f32.gmra.mxu0 %v682
    %v832 = vpop.f32.mrf.mxu0
    %v833 = vadd.f32 0.0, %v832
    %v834 = vpop.f32.mrf.mxu0
    %835 = vmatprep.mubr.f32.mxu0 0.0
    %836 = vmatmul.mubr.f32.gmra.mxu0 %v683
    %v837 = vpop.f32.mrf.mxu0
    %v838 = vadd.f32 0.0, %v837
    %v839 = vpop.f32.mrf.mxu0
    %840 = vmatprep.mubr.f32.mxu0 0.0
    %841 = vmatmul.mubr.f32.gmra.mxu0 %v684
    %v842 = vpop.f32.mrf.mxu0
    %v843 = vadd.f32 0.0, %v842
    %v844 = vpop.f32.mrf.mxu0
    %845 = vmatprep.mubr.f32.mxu0 0.0
    %846 = vmatmul.mubr.f32.gmra.mxu0 %v685
    %v847 = vpop.f32.mrf.mxu0
    %v848 = vadd.f32 0.0, %v847
    %v849 = vpop.f32.mrf.mxu0
    %850 = vmatprep.mubr.f32.mxu0 0.0
    %851 = vmatmul.mubr.f32.gmra.mxu0 %v686
    %v852 = vpop.f32.mrf.mxu0
    %v853 = vadd.f32 0.0, %v852
    %v854 = vpop.f32.mrf.mxu0
    %855 = vmatprep.mubr.f32.mxu0 0.0
    %856 = vmatmul.mubr.f32.gmra.mxu0 %v687
    %v857 = vpop.f32.mrf.mxu0
    %v858 = vadd.f32 0.0, %v857
    %v859 = vpop.f32.mrf.mxu0
    %860 = vmatprep.mubr.f32.mxu0 0.0
    %861 = vmatmul.mubr.f32.gmra.mxu0 %v688
    %v862 = vpop.f32.mrf.mxu0
    %v863 = vadd.f32 0.0, %v862
    %v864 = vpop.f32.mrf.mxu0
    %865 = vmatprep.mubr.f32.mxu0 0.0
    %866 = vmatmul.mubr.f32.gmra.mxu0 %v689
    %v867 = vpop.f32.mrf.mxu0
    %v868 = vadd.f32 0.0, %v867
    %v869 = vpop.f32.mrf.mxu0
    %870 = vmatprep.mubr.f32.mxu0 0.0
    %871 = vmatmul.mubr.f32.gmra.mxu0 %v690
    %v872 = vpop.f32.mrf.mxu0
    %v873 = vadd.f32 0.0, %v872
    %v874 = vpop.f32.mrf.mxu0
    %875 = vmatprep.mubr.f32.mxu0 0.0
    %876 = vmatmul.mubr.f32.gmra.mxu0 %v691
    %v877 = vpop.f32.mrf.mxu0
    %v878 = vadd.f32 0.0, %v877
    %v879 = vpop.f32.mrf.mxu0
    %880 = vmatprep.mubr.f32.mxu0 0.0
    %881 = vmatmul.mubr.f32.gmra.mxu0 %v692
    %v882 = vpop.f32.mrf.mxu0
    %v883 = vadd.f32 0.0, %v882
    %v884 = vpop.f32.mrf.mxu0
    %885 = vmatprep.mubr.f32.mxu0 0.0
    %886 = vmatmul.mubr.f32.gmra.mxu0 %v693
    %v887 = vpop.f32.mrf.mxu0
    %v888 = vadd.f32 0.0, %v887
    %v889 = vpop.f32.mrf.mxu0
    %890 = vmatprep.mubr.f32.mxu0 0.0
    %891 = vmatmul.mubr.f32.gmra.mxu0 %v694
    %v892 = vpop.f32.mrf.mxu0
    %v893 = vadd.f32 0.0, %v892
    %v894 = vpop.f32.mrf.mxu0
    %895 = vmatprep.mubr.f32.mxu0 0.0
    %896 = vmatmul.mubr.f32.gmra.mxu0 %v695
    %v897 = vpop.f32.mrf.mxu0
    %v898 = vadd.f32 0.0, %v897
    %v899 = vpop.f32.mrf.mxu0
    %900 = vmatprep.mubr.f32.mxu0 0.0
    %901 = vmatmul.mubr.f32.gmra.mxu0 %v696
    %v902 = vpop.f32.mrf.mxu0
    %v903 = vadd.f32 0.0, %v902
    %v904 = vpop.f32.mrf.mxu0
    %905 = vmatprep.mubr.f32.mxu0 0.0
    %906 = vmatmul.mubr.f32.gmra.mxu0 %v697
    %v907 = vpop.f32.mrf.mxu0
    %v908 = vadd.f32 0.0, %v907
    %v909 = vpop.f32.mrf.mxu0
    %910 = vmatprep.mubr.f32.mxu0 0.0
    %911 = vmatmul.mubr.f32.gmra.mxu0 %v698
    %v912 = vpop.f32.mrf.mxu0
    %v913 = vadd.f32 0.0, %v912
    %v914 = vpop.f32.mrf.mxu0
    %915 = vmatprep.mubr.f32.mxu0 0.0
    %916 = vmatmul.mubr.f32.gmra.mxu0 %v699
    %v917 = vpop.f32.mrf.mxu0
    %v918 = vadd.f32 0.0, %v917
    %v919 = vpop.f32.mrf.mxu0
    %920 = vmatprep.mubr.f32.mxu0 0.0
    %921 = vmatmul.mubr.f32.gmra.mxu0 %v700
    %v922 = vpop.f32.mrf.mxu0
    %v923 = vadd.f32 0.0, %v922
    %v924 = vpop.f32.mrf.mxu0
    %925 = vmatprep.mubr.f32.mxu0 0.0
    %926 = vmatmul.mubr.f32.gmra.mxu0 %v701
    %v927 = vpop.f32.mrf.mxu0
    %v928 = vadd.f32 0.0, %v927
    %v929 = vpop.f32.mrf.mxu0
    %930 = vmatprep.mubr.f32.mxu0 0.0
    %931 = vmatmul.mubr.f32.gmra.mxu0 %v702
    %v932 = vpop.f32.mrf.mxu0
    %v933 = vadd.f32 0.0, %v932
    %v934 = vpop.f32.mrf.mxu0
    %935 = vmatprep.mubr.f32.mxu0 0.0
    %936 = vmatmul.mubr.f32.gmra.mxu0 %v703
    %v937 = vpop.f32.mrf.mxu0
    %v938 = vadd.f32 0.0, %v937
    %v939 = vpop.f32.mrf.mxu0
    %940 = vmatprep.mubr.f32.mxu0 0.0
    %941 = vmatmul.mubr.f32.gmra.mxu0 %v704
    %v942 = vpop.f32.mrf.mxu0
    %v943 = vadd.f32 0.0, %v942
    %v944 = vpop.f32.mrf.mxu0
    %945 = vmatprep.mubr.f32.mxu0 0.0
    %946 = vmatmul.mubr.f32.gmra.mxu0 %v705
    %v947 = vpop.f32.mrf.mxu0
    %v948 = vadd.f32 0.0, %v947
    %v949 = vpop.f32.mrf.mxu0
    %950 = vmatprep.mubr.f32.mxu0 0.0
    %951 = vmatmul.mubr.f32.gmra.mxu0 %v706
    %v952 = vpop.f32.mrf.mxu0
    %v953 = vadd.f32 0.0, %v952
    %v954 = vpop.f32.mrf.mxu0
    %955 = vmatprep.mubr.f32.mxu0 0.0
    %956 = vmatmul.mubr.f32.gmra.mxu0 %v707
    %v957 = vpop.f32.mrf.mxu0
    %v958 = vadd.f32 0.0, %v957
    %v959 = vpop.f32.mrf.mxu0
    %960 = vmatprep.mubr.f32.mxu0 0.0
    %961 = vmatmul.mubr.f32.gmra.mxu0 %v708
    %v962 = vpop.f32.mrf.mxu0
    %v963 = vadd.f32 0.0, %v962
    %v964 = vpop.f32.mrf.mxu0
    %965 = vdwg.mxu0
    %966 = vmatprep.subr.mxu0 0.0
    %967 = vmatpush1.msra.mxu0 %v724
    %968 = vmatprep.subr.mxu0 0.0
    %969 = vmatpush1.msra.mxu0 %v723
    %970 = vmatprep.subr.mxu0 0.0
    %971 = vmatpush1.msra.mxu0 %v722
    %972 = vmatprep.subr.mxu0 0.0
    %973 = vmatpush1.msra.mxu0 %v721
    %974 = vmatprep.subr.mxu0 0.0
    %975 = vmatpush1.msra.mxu0 %v720
    %976 = vmatprep.subr.mxu0 0.0
    %977 = vmatpush1.msra.mxu0 %v719
    %978 = vmatprep.subr.mxu0 0.0
    %979 = vmatpush1.msra.mxu0 %v718
    %980 = vmatprep.subr.mxu0 0.0
    %981 = vmatpush1.msra.mxu0 %v717
    %982 = vmatprep.subr.mxu0 0.0
    %983 = vmatpush1.msra.mxu0 %v716
    %984 = vmatprep.subr.mxu0 0.0
    %985 = vmatpush1.msra.mxu0 %v715
    %986 = vmatprep.subr.mxu0 0.0
    %987 = vmatpush1.msra.mxu0 %v714
    %988 = vmatprep.subr.mxu0 0.0
    %989 = vmatpush1.msra.mxu0 %v713
    %990 = vmatprep.subr.mxu0 0.0
    %991 = vmatpush1.msra.mxu0 %v712
    %992 = vmatprep.subr.mxu0 0.0
    %993 = vmatpush1.msra.mxu0 %v711
    %994 = vmatprep.subr.mxu0 0.0
    %995 = vmatpush1.msra.mxu0 %v710
    %996 = vmatprep.subr.mxu0 0.0
    %997 = vmatpush1.msra.mxu0 %v709
    %998 = vmatprep.subr.mxu0 0.0
    %999 = vmatpush2.msra.mxu0 0.0
    %1000 = vmatprep.subr.mxu0 0.0
    %1001 = vmatpush2.msra.mxu0 0.0
    %1002 = vmatprep.subr.mxu0 0.0
    %1003 = vmatpush2.msra.mxu0 0.0
    %1004 = vmatprep.subr.mxu0 0.0
    %1005 = vmatpush2.msra.mxu0 0.0
    %1006 = vmatprep.subr.mxu0 0.0
    %1007 = vmatpush2.msra.mxu0 0.0
    %1008 = vmatprep.subr.mxu0 0.0
    %1009 = vmatpush2.msra.mxu0 0.0
    %1010 = vmatprep.subr.mxu0 0.0
    %1011 = vmatpush2.msra.mxu0 0.0
    %1012 = vmatprep.subr.mxu0 0.0
    %1013 = vmatpush2.msra.mxu0 0.0
    %1014 = vmatprep.subr.mxu0 0.0
    %1015 = vmatpush2.msra.mxu0 0.0
    %1016 = vmatprep.subr.mxu0 0.0
    %1017 = vmatpush2.msra.mxu0 0.0
    %1018 = vmatprep.subr.mxu0 0.0
    %1019 = vmatpush2.msra.mxu0 0.0
    %1020 = vmatprep.subr.mxu0 0.0
    %1021 = vmatpush2.msra.mxu0 0.0
    %1022 = vmatprep.subr.mxu0 0.0
    %1023 = vmatpush2.msra.mxu0 0.0
    %1024 = vmatprep.subr.mxu0 0.0
    %1025 = vmatpush2.msra.mxu0 0.0
    %1026 = vmatprep.subr.mxu0 0.0
    %1027 = vmatpush2.msra.mxu0 0.0
    %1028 = vmatprep.subr.mxu0 0.0
    %1029 = vmatpush2.msra.mxu0 0.0
    %1030 = vmatprep.mubr.f32.mxu0 0.0
    %1031 = vmatmul.mubr.f32.gmra.mxu0 %v356
    %v1032 = vpop.f32.mrf.mxu0
    %v1033 = vadd.f32 %v808, %v1032
    %v1034 = vpop.f32.mrf.mxu0
    %1035 = vmatprep.mubr.f32.mxu0 0.0
    %1036 = vmatmul.mubr.f32.gmra.mxu0 %v357
    %v1037 = vpop.f32.mrf.mxu0
    %v1038 = vadd.f32 %v813, %v1037
    %v1039 = vpop.f32.mrf.mxu0
    %1040 = vmatprep.mubr.f32.mxu0 0.0
    %1041 = vmatmul.mubr.f32.gmra.mxu0 %v358
    %v1042 = vpop.f32.mrf.mxu0
    %v1043 = vadd.f32 %v818, %v1042
    %v1044 = vpop.f32.mrf.mxu0
    %1045 = vmatprep.mubr.f32.mxu0 0.0
    %1046 = vmatmul.mubr.f32.gmra.mxu0 %v359
    %v1047 = vpop.f32.mrf.mxu0
    %v1048 = vadd.f32 %v823, %v1047
    %v1049 = vpop.f32.mrf.mxu0
    %1050 = vmatprep.mubr.f32.mxu0 0.0
    %1051 = vmatmul.mubr.f32.gmra.mxu0 %v360
    %v1052 = vpop.f32.mrf.mxu0
    %v1053 = vadd.f32 %v828, %v1052
    %v1054 = vpop.f32.mrf.mxu0
    %1055 = vmatprep.mubr.f32.mxu0 0.0
    %1056 = vmatmul.mubr.f32.gmra.mxu0 %v361
    %v1057 = vpop.f32.mrf.mxu0
    %v1058 = vadd.f32 %v833, %v1057
    %v1059 = vpop.f32.mrf.mxu0
    %1060 = vmatprep.mubr.f32.mxu0 0.0
    %1061 = vmatmul.mubr.f32.gmra.mxu0 %v362
    %v1062 = vpop.f32.mrf.mxu0
    %v1063 = vadd.f32 %v838, %v1062
    %v1064 = vpop.f32.mrf.mxu0
    %1065 = vmatprep.mubr.f32.mxu0 0.0
    %1066 = vmatmul.mubr.f32.gmra.mxu0 %v363
    %v1067 = vpop.f32.mrf.mxu0
    %v1068 = vadd.f32 %v843, %v1067
    %v1069 = vpop.f32.mrf.mxu0
    %1070 = vmatprep.mubr.f32.mxu0 0.0
    %1071 = vmatmul.mubr.f32.gmra.mxu0 %v364
    %v1072 = vpop.f32.mrf.mxu0
    %v1073 = vadd.f32 %v848, %v1072
    %v1074 = vpop.f32.mrf.mxu0
    %1075 = vmatprep.mubr.f32.mxu0 0.0
    %1076 = vmatmul.mubr.f32.gmra.mxu0 %v365
    %v1077 = vpop.f32.mrf.mxu0
    %v1078 = vadd.f32 %v853, %v1077
    %v1079 = vpop.f32.mrf.mxu0
    %1080 = vmatprep.mubr.f32.mxu0 0.0
    %1081 = vmatmul.mubr.f32.gmra.mxu0 %v366
    %v1082 = vpop.f32.mrf.mxu0
    %v1083 = vadd.f32 %v858, %v1082
    %v1084 = vpop.f32.mrf.mxu0
    %1085 = vmatprep.mubr.f32.mxu0 0.0
    %1086 = vmatmul.mubr.f32.gmra.mxu0 %v367
    %v1087 = vpop.f32.mrf.mxu0
    %v1088 = vadd.f32 %v863, %v1087
    %v1089 = vpop.f32.mrf.mxu0
    %1090 = vmatprep.mubr.f32.mxu0 0.0
    %1091 = vmatmul.mubr.f32.gmra.mxu0 %v368
    %v1092 = vpop.f32.mrf.mxu0
    %v1093 = vadd.f32 %v868, %v1092
    %v1094 = vpop.f32.mrf.mxu0
    %1095 = vmatprep.mubr.f32.mxu0 0.0
    %1096 = vmatmul.mubr.f32.gmra.mxu0 %v369
    %v1097 = vpop.f32.mrf.mxu0
    %v1098 = vadd.f32 %v873, %v1097
    %v1099 = vpop.f32.mrf.mxu0
    %1100 = vmatprep.mubr.f32.mxu0 0.0
    %1101 = vmatmul.mubr.f32.gmra.mxu0 %v370
    %v1102 = vpop.f32.mrf.mxu0
    %v1103 = vadd.f32 %v878, %v1102
    %v1104 = vpop.f32.mrf.mxu0
    %1105 = vmatprep.mubr.f32.mxu0 0.0
    %1106 = vmatmul.mubr.f32.gmra.mxu0 %v371
    %v1107 = vpop.f32.mrf.mxu0
    %v1108 = vadd.f32 %v883, %v1107
    %v1109 = vpop.f32.mrf.mxu0
    %1110 = vmatprep.mubr.f32.mxu0 0.0
    %1111 = vmatmul.mubr.f32.gmra.mxu0 %v372
    %v1112 = vpop.f32.mrf.mxu0
    %v1113 = vadd.f32 %v888, %v1112
    %v1114 = vpop.f32.mrf.mxu0
    %1115 = vmatprep.mubr.f32.mxu0 0.0
    %1116 = vmatmul.mubr.f32.gmra.mxu0 %v373
    %v1117 = vpop.f32.mrf.mxu0
    %v1118 = vadd.f32 %v893, %v1117
    %v1119 = vpop.f32.mrf.mxu0
    %1120 = vmatprep.mubr.f32.mxu0 0.0
    %1121 = vmatmul.mubr.f32.gmra.mxu0 %v374
    %v1122 = vpop.f32.mrf.mxu0
    %v1123 = vadd.f32 %v898, %v1122
    %v1124 = vpop.f32.mrf.mxu0
    %1125 = vmatprep.mubr.f32.mxu0 0.0
    %1126 = vmatmul.mubr.f32.gmra.mxu0 %v375
    %v1127 = vpop.f32.mrf.mxu0
    %v1128 = vadd.f32 %v903, %v1127
    %v1129 = vpop.f32.mrf.mxu0
    %1130 = vmatprep.mubr.f32.mxu0 0.0
    %1131 = vmatmul.mubr.f32.gmra.mxu0 %v376
    %v1132 = vpop.f32.mrf.mxu0
    %v1133 = vadd.f32 %v908, %v1132
    %v1134 = vpop.f32.mrf.mxu0
    %1135 = vmatprep.mubr.f32.mxu0 0.0
    %1136 = vmatmul.mubr.f32.gmra.mxu0 %v377
    %v1137 = vpop.f32.mrf.mxu0
    %v1138 = vadd.f32 %v913, %v1137
    %v1139 = vpop.f32.mrf.mxu0
    %1140 = vmatprep.mubr.f32.mxu0 0.0
    %1141 = vmatmul.mubr.f32.gmra.mxu0 %v378
    %v1142 = vpop.f32.mrf.mxu0
    %v1143 = vadd.f32 %v918, %v1142
    %v1144 = vpop.f32.mrf.mxu0
    %1145 = vmatprep.mubr.f32.mxu0 0.0
    %1146 = vmatmul.mubr.f32.gmra.mxu0 %v379
    %v1147 = vpop.f32.mrf.mxu0
    %v1148 = vadd.f32 %v923, %v1147
    %v1149 = vpop.f32.mrf.mxu0
    %1150 = vmatprep.mubr.f32.mxu0 0.0
    %1151 = vmatmul.mubr.f32.gmra.mxu0 %v380
    %v1152 = vpop.f32.mrf.mxu0
    %v1153 = vadd.f32 %v928, %v1152
    %v1154 = vpop.f32.mrf.mxu0
    %1155 = vmatprep.mubr.f32.mxu0 0.0
    %1156 = vmatmul.mubr.f32.gmra.mxu0 %v381
    %v1157 = vpop.f32.mrf.mxu0
    %v1158 = vadd.f32 %v933, %v1157
    %v1159 = vpop.f32.mrf.mxu0
    %1160 = vmatprep.mubr.f32.mxu0 0.0
    %1161 = vmatmul.mubr.f32.gmra.mxu0 %v382
    %v1162 = vpop.f32.mrf.mxu0
    %v1163 = vadd.f32 %v938, %v1162
    %v1164 = vpop.f32.mrf.mxu0
    %1165 = vmatprep.mubr.f32.mxu0 0.0
    %1166 = vmatmul.mubr.f32.gmra.mxu0 %v383
    %v1167 = vpop.f32.mrf.mxu0
    %v1168 = vadd.f32 %v943, %v1167
    %v1169 = vpop.f32.mrf.mxu0
    %1170 = vmatprep.mubr.f32.mxu0 0.0
    %1171 = vmatmul.mubr.f32.gmra.mxu0 %v384
    %v1172 = vpop.f32.mrf.mxu0
    %v1173 = vadd.f32 %v948, %v1172
    %v1174 = vpop.f32.mrf.mxu0
    %1175 = vmatprep.mubr.f32.mxu0 0.0
    %1176 = vmatmul.mubr.f32.gmra.mxu0 %v385
    %v1177 = vpop.f32.mrf.mxu0
    %v1178 = vadd.f32 %v953, %v1177
    %v1179 = vpop.f32.mrf.mxu0
    %1180 = vmatprep.mubr.f32.mxu0 0.0
    %1181 = vmatmul.mubr.f32.gmra.mxu0 %v386
    %v1182 = vpop.f32.mrf.mxu0
    %v1183 = vadd.f32 %v958, %v1182
    %v1184 = vpop.f32.mrf.mxu0
    %1185 = vmatprep.mubr.f32.mxu0 0.0
    %1186 = vmatmul.mubr.f32.gmra.mxu0 %v387
    %v1187 = vpop.f32.mrf.mxu0
    %v1188 = vadd.f32 %v963, %v1187
    %v1189 = vpop.f32.mrf.mxu0
    %1190 = vdwg.mxu0
    %v1191 = vld [vmem:[#allocation2] sm:$0x1]
    %v1193 = vlaneseq
    %v1194 = vshrl.u32 %v1193, 7
    %v1195 = vsub.s32 0, %v1194
    %v1196 = vrot.slane %v1191, %v1195
    %v1198 = vadd.f32 %v1033, %v1196
    %v1199 = vadd.f32 %v1038, %v1196
    %v1200 = vadd.f32 %v1043, %v1196
    %v1201 = vadd.f32 %v1048, %v1196
    %v1202 = vadd.f32 %v1053, %v1196
    %v1203 = vadd.f32 %v1058, %v1196
    %v1204 = vadd.f32 %v1063, %v1196
    %v1205 = vadd.f32 %v1068, %v1196
    %v1206 = vadd.f32 %v1073, %v1196
    %v1207 = vadd.f32 %v1078, %v1196
    %v1208 = vadd.f32 %v1083, %v1196
    %v1209 = vadd.f32 %v1088, %v1196
    %v1210 = vadd.f32 %v1093, %v1196
    %v1211 = vadd.f32 %v1098, %v1196
    %v1212 = vadd.f32 %v1103, %v1196
    %v1213 = vadd.f32 %v1108, %v1196
    %v1214 = vadd.f32 %v1113, %v1196
    %v1215 = vadd.f32 %v1118, %v1196
    %v1216 = vadd.f32 %v1123, %v1196
    %v1217 = vadd.f32 %v1128, %v1196
    %v1218 = vadd.f32 %v1133, %v1196
    %v1219 = vadd.f32 %v1138, %v1196
    %v1220 = vadd.f32 %v1143, %v1196
    %v1221 = vadd.f32 %v1148, %v1196
    %v1222 = vadd.f32 %v1153, %v1196
    %v1223 = vadd.f32 %v1158, %v1196
    %v1224 = vadd.f32 %v1163, %v1196
    %v1225 = vadd.f32 %v1168, %v1196
    %v1226 = vadd.f32 %v1173, %v1196
    %v1227 = vadd.f32 %v1178, %v1196
    %v1228 = vadd.f32 %v1183, %v1196
    %v1229 = vadd.f32 %v1188, %v1196
    %v1230 = vxor.u32 %v1198, 2147483648
    %v1231 = vxor.u32 %v1199, 2147483648
    %v1232 = vxor.u32 %v1200, 2147483648
    %v1233 = vxor.u32 %v1201, 2147483648
    %v1234 = vxor.u32 %v1202, 2147483648
    %v1235 = vxor.u32 %v1203, 2147483648
    %v1236 = vxor.u32 %v1204, 2147483648
    %v1237 = vxor.u32 %v1205, 2147483648
    %v1238 = vxor.u32 %v1206, 2147483648
    %v1239 = vxor.u32 %v1207, 2147483648
    %v1240 = vxor.u32 %v1208, 2147483648
    %v1241 = vxor.u32 %v1209, 2147483648
    %v1242 = vxor.u32 %v1210, 2147483648
    %v1243 = vxor.u32 %v1211, 2147483648
    %v1244 = vxor.u32 %v1212, 2147483648
    %v1245 = vxor.u32 %v1213, 2147483648
    %v1246 = vxor.u32 %v1214, 2147483648
    %v1247 = vxor.u32 %v1215, 2147483648
    %v1248 = vxor.u32 %v1216, 2147483648
    %v1249 = vxor.u32 %v1217, 2147483648
    %v1250 = vxor.u32 %v1218, 2147483648
    %v1251 = vxor.u32 %v1219, 2147483648
    %v1252 = vxor.u32 %v1220, 2147483648
    %v1253 = vxor.u32 %v1221, 2147483648
    %v1254 = vxor.u32 %v1222, 2147483648
    %v1255 = vxor.u32 %v1223, 2147483648
    %v1256 = vxor.u32 %v1224, 2147483648
    %v1257 = vxor.u32 %v1225, 2147483648
    %v1258 = vxor.u32 %v1226, 2147483648
    %v1259 = vxor.u32 %v1227, 2147483648
    %v1260 = vxor.u32 %v1228, 2147483648
    %v1261 = vxor.u32 %v1229, 2147483648
    %v1262 = vmul.f32 %v1230, 1.442695
    %v1263 = vpow.pop %v1262
    %v1264 = vmul.f32 %v1231, 1.442695
    %v1265 = vpow.pop %v1264
    %v1266 = vmul.f32 %v1232, 1.442695
    %v1267 = vpow.pop %v1266
    %v1268 = vmul.f32 %v1233, 1.442695
    %v1269 = vpow.pop %v1268
    %v1270 = vmul.f32 %v1234, 1.442695
    %v1271 = vpow.pop %v1270
    %v1272 = vmul.f32 %v1235, 1.442695
    %v1273 = vpow.pop %v1272
    %v1274 = vmul.f32 %v1236, 1.442695
    %v1275 = vpow.pop %v1274
    %v1276 = vmul.f32 %v1237, 1.442695
    %v1277 = vpow.pop %v1276
    %v1278 = vmul.f32 %v1238, 1.442695
    %v1279 = vpow.pop %v1278
    %v1280 = vmul.f32 %v1239, 1.442695
    %v1281 = vpow.pop %v1280
    %v1282 = vmul.f32 %v1240, 1.442695
    %v1283 = vpow.pop %v1282
    %v1284 = vmul.f32 %v1241, 1.442695
    %v1285 = vpow.pop %v1284
    %v1286 = vmul.f32 %v1242, 1.442695
    %v1287 = vpow.pop %v1286
    %v1288 = vmul.f32 %v1243, 1.442695
    %v1289 = vpow.pop %v1288
    %v1290 = vmul.f32 %v1244, 1.442695
    %v1291 = vpow.pop %v1290
    %v1292 = vmul.f32 %v1245, 1.442695
    %v1293 = vpow.pop %v1292
    %v1294 = vmul.f32 %v1246, 1.442695
    %v1295 = vpow.pop %v1294
    %v1296 = vmul.f32 %v1247, 1.442695
    %v1297 = vpow.pop %v1296
    %v1298 = vmul.f32 %v1248, 1.442695
    %v1299 = vpow.pop %v1298
    %v1300 = vmul.f32 %v1249, 1.442695
    %v1301 = vpow.pop %v1300
    %v1302 = vmul.f32 %v1250, 1.442695
    %v1303 = vpow.pop %v1302
    %v1304 = vmul.f32 %v1251, 1.442695
    %v1305 = vpow.pop %v1304
    %v1306 = vmul.f32 %v1252, 1.442695
    %v1307 = vpow.pop %v1306
    %v1308 = vmul.f32 %v1253, 1.442695
    %v1309 = vpow.pop %v1308
    %v1310 = vmul.f32 %v1254, 1.442695
    %v1311 = vpow.pop %v1310
    %v1312 = vmul.f32 %v1255, 1.442695
    %v1313 = vpow.pop %v1312
    %v1314 = vmul.f32 %v1256, 1.442695
    %v1315 = vpow.pop %v1314
    %v1316 = vmul.f32 %v1257, 1.442695
    %v1317 = vpow.pop %v1316
    %v1318 = vmul.f32 %v1258, 1.442695
    %v1319 = vpow.pop %v1318
    %v1320 = vmul.f32 %v1259, 1.442695
    %v1321 = vpow.pop %v1320
    %v1322 = vmul.f32 %v1260, 1.442695
    %v1323 = vpow.pop %v1322
    %v1324 = vmul.f32 %v1261, 1.442695
    %v1325 = vpow.pop %v1324
    %v1326 = vadd.f32 %v1263, 1.0
    %v1327 = vadd.f32 %v1265, 1.0
    %v1328 = vadd.f32 %v1267, 1.0
    %v1329 = vadd.f32 %v1269, 1.0
    %v1330 = vadd.f32 %v1271, 1.0
    %v1331 = vadd.f32 %v1273, 1.0
    %v1332 = vadd.f32 %v1275, 1.0
    %v1333 = vadd.f32 %v1277, 1.0
    %v1334 = vadd.f32 %v1279, 1.0
    %v1335 = vadd.f32 %v1281, 1.0
    %v1336 = vadd.f32 %v1283, 1.0
    %v1337 = vadd.f32 %v1285, 1.0
    %v1338 = vadd.f32 %v1287, 1.0
    %v1339 = vadd.f32 %v1289, 1.0
    %v1340 = vadd.f32 %v1291, 1.0
    %v1341 = vadd.f32 %v1293, 1.0
    %v1342 = vadd.f32 %v1295, 1.0
    %v1343 = vadd.f32 %v1297, 1.0
    %v1344 = vadd.f32 %v1299, 1.0
    %v1345 = vadd.f32 %v1301, 1.0
    %v1346 = vadd.f32 %v1303, 1.0
    %v1347 = vadd.f32 %v1305, 1.0
    %v1348 = vadd.f32 %v1307, 1.0
    %v1349 = vadd.f32 %v1309, 1.0
    %v1350 = vadd.f32 %v1311, 1.0
    %v1351 = vadd.f32 %v1313, 1.0
    %v1352 = vadd.f32 %v1315, 1.0
    %v1353 = vadd.f32 %v1317, 1.0
    %v1354 = vadd.f32 %v1319, 1.0
    %v1355 = vadd.f32 %v1321, 1.0
    %v1356 = vadd.f32 %v1323, 1.0
    %v1357 = vadd.f32 %v1325, 1.0
    %v1358 = vrcp.pop %v1326
    %v1359 = vmul.f32 1.0, %v1358
    %v1360 = vrcp.pop %v1327
    %v1361 = vmul.f32 1.0, %v1360
    %v1362 = vrcp.pop %v1328
    %v1363 = vmul.f32 1.0, %v1362
    %v1364 = vrcp.pop %v1329
    %v1365 = vmul.f32 1.0, %v1364
    %v1366 = vrcp.pop %v1330
    %v1367 = vmul.f32 1.0, %v1366
    %v1368 = vrcp.pop %v1331
    %v1369 = vmul.f32 1.0, %v1368
    %v1370 = vrcp.pop %v1332
    %v1371 = vmul.f32 1.0, %v1370
    %v1372 = vrcp.pop %v1333
    %v1373 = vmul.f32 1.0, %v1372
    %v1374 = vrcp.pop %v1334
    %v1375 = vmul.f32 1.0, %v1374
    %v1376 = vrcp.pop %v1335
    %v1377 = vmul.f32 1.0, %v1376
    %v1378 = vrcp.pop %v1336
    %v1379 = vmul.f32 1.0, %v1378
    %v1380 = vrcp.pop %v1337
    %v1381 = vmul.f32 1.0, %v1380
    %v1382 = vrcp.pop %v1338
    %v1383 = vmul.f32 1.0, %v1382
    %v1384 = vrcp.pop %v1339
    %v1385 = vmul.f32 1.0, %v1384
    %v1386 = vrcp.pop %v1340
    %v1387 = vmul.f32 1.0, %v1386
    %v1388 = vrcp.pop %v1341
    %v1389 = vmul.f32 1.0, %v1388
    %v1390 = vrcp.pop %v1342
    %v1391 = vmul.f32 1.0, %v1390
    %v1392 = vrcp.pop %v1343
    %v1393 = vmul.f32 1.0, %v1392
    %v1394 = vrcp.pop %v1344
    %v1395 = vmul.f32 1.0, %v1394
    %v1396 = vrcp.pop %v1345
    %v1397 = vmul.f32 1.0, %v1396
    %v1398 = vrcp.pop %v1346
    %v1399 = vmul.f32 1.0, %v1398
    %v1400 = vrcp.pop %v1347
    %v1401 = vmul.f32 1.0, %v1400
    %v1402 = vrcp.pop %v1348
    %v1403 = vmul.f32 1.0, %v1402
    %v1404 = vrcp.pop %v1349
    %v1405 = vmul.f32 1.0, %v1404
    %v1406 = vrcp.pop %v1350
    %v1407 = vmul.f32 1.0, %v1406
    %v1408 = vrcp.pop %v1351
    %v1409 = vmul.f32 1.0, %v1408
    %v1410 = vrcp.pop %v1352
    %v1411 = vmul.f32 1.0, %v1410
    %v1412 = vrcp.pop %v1353
    %v1413 = vmul.f32 1.0, %v1412
    %v1414 = vrcp.pop %v1354
    %v1415 = vmul.f32 1.0, %v1414
    %v1416 = vrcp.pop %v1355
    %v1417 = vmul.f32 1.0, %v1416
    %v1418 = vrcp.pop %v1356
    %v1419 = vmul.f32 1.0, %v1418
    %v1420 = vrcp.pop %v1357
    %v1421 = vmul.f32 1.0, %v1420
    %vm1422 = vcmask 7168
    %1423 = vst.msk [vmem:[#allocation3] sm:$0xff] %vm1422, %v1359
    %1424 = vst.msk [vmem:[#allocation3 + $0x8] sm:$0xff] %vm1422, %v1361
    %1425 = vst.msk [vmem:[#allocation3 + $0x10] sm:$0xff] %vm1422, %v1363
    %1426 = vst.msk [vmem:[#allocation3 + $0x18] sm:$0xff] %vm1422, %v1365
    %1427 = vst.msk [vmem:[#allocation3 + $0x20] sm:$0xff] %vm1422, %v1367
    %1428 = vst.msk [vmem:[#allocation3 + $0x28] sm:$0xff] %vm1422, %v1369
    %1429 = vst.msk [vmem:[#allocation3 + $0x30] sm:$0xff] %vm1422, %v1371
    %1430 = vst.msk [vmem:[#allocation3 + $0x38] sm:$0xff] %vm1422, %v1373
    %1431 = vst.msk [vmem:[#allocation3 + $0x40] sm:$0xff] %vm1422, %v1375
    %1432 = vst.msk [vmem:[#allocation3 + $0x48] sm:$0xff] %vm1422, %v1377
    %1433 = vst.msk [vmem:[#allocation3 + $0x50] sm:$0xff] %vm1422, %v1379
    %1434 = vst.msk [vmem:[#allocation3 + $0x58] sm:$0xff] %vm1422, %v1381
    %1435 = vst.msk [vmem:[#allocation3 + $0x60] sm:$0xff] %vm1422, %v1383
    %1436 = vst.msk [vmem:[#allocation3 + $0x68] sm:$0xff] %vm1422, %v1385
    %1437 = vst.msk [vmem:[#allocation3 + $0x70] sm:$0xff] %vm1422, %v1387
    %1438 = vst.msk [vmem:[#allocation3 + $0x78] sm:$0xff] %vm1422, %v1389
    %1439 = vst.msk [vmem:[#allocation3 + $0x80] sm:$0xff] %vm1422, %v1391
    %1440 = vst.msk [vmem:[#allocation3 + $0x88] sm:$0xff] %vm1422, %v1393
    %1441 = vst.msk [vmem:[#allocation3 + $0x90] sm:$0xff] %vm1422, %v1395
    %1442 = vst.msk [vmem:[#allocation3 + $0x98] sm:$0xff] %vm1422, %v1397
    %1443 = vst.msk [vmem:[#allocation3 + $0xa0] sm:$0xff] %vm1422, %v1399
    %1444 = vst.msk [vmem:[#allocation3 + $0xa8] sm:$0xff] %vm1422, %v1401
    %1445 = vst.msk [vmem:[#allocation3 + $0xb0] sm:$0xff] %vm1422, %v1403
    %1446 = vst.msk [vmem:[#allocation3 + $0xb8] sm:$0xff] %vm1422, %v1405
    %1447 = vst.msk [vmem:[#allocation3 + $0xc0] sm:$0xff] %vm1422, %v1407
    %1448 = vst.msk [vmem:[#allocation3 + $0xc8] sm:$0xff] %vm1422, %v1409
    %1449 = vst.msk [vmem:[#allocation3 + $0xd0] sm:$0xff] %vm1422, %v1411
    %1450 = vst.msk [vmem:[#allocation3 + $0xd8] sm:$0xff] %vm1422, %v1413
    %1451 = vst.msk [vmem:[#allocation3 + $0xe0] sm:$0xff] %vm1422, %v1415
    %1452 = vst.msk [vmem:[#allocation3 + $0xe8] sm:$0xff] %vm1422, %v1417
    %1453 = vst.msk [vmem:[#allocation3 + $0xf0] sm:$0xff] %vm1422, %v1419
    %1454 = vst.msk [vmem:[#allocation3 + $0xf8] sm:$0xff] %vm1422, %v1421
    // Predicated region
    $region30: #{snn_forward.1} parent=1 // pred_check
      _
    $region31: #{snn_forward.1} parent=1 // pred_check_branch
      %1456 = sbr.rel (0) target = $region33
    $region32: #{snn_forward.1} parent=1 // pred_region
      // Predicated region
      $region34: #{snn_forward.1} parent=32 // pred_check
        _
      $region35: #{snn_forward.1} parent=32 // pred_check_branch
        %1458 = sbr.rel (0) target = $region37
      $region36: #{snn_forward.1} parent=32 // pred_region
        // Predicated region
        $region38: #{snn_forward.1} parent=36 // pred_check
          _
        $region39: #{snn_forward.1} parent=36 // pred_check_branch
          %1460 = sbr.rel (0) target = $region41
        $region40: #{snn_forward.1} parent=36 // pred_region
          // Predicated region
          $region53: #{snn_forward.1} parent=40 // pred_check
            _
          $region54: #{snn_forward.1} parent=40 // pred_check_branch
            %1478 = sbr.rel (0) target = $region56
          $region55: #{snn_forward.1} parent=40 // pred_region
            loop: start=0, step=1, limit=1
            $region57: #{snn_forward.1} parent=55 // loop_pre_header
              _
            $region58: #{snn_forward.1} parent=55 // loop_header
              %s1480 = sphi 0, %s1484
              %p1481 = scmp.ge.s32.totalorder %s1480, 1
              %s1485 = sphi [#allocation3], [#allocation3]
              %s1486 = sphi %s7, %s7
            $region59: #{snn_forward.1} parent=55 // loop_header_branch
              %1483 = sbr.rel (%p1481) target = $region63
            $region60: #{snn_forward.1} parent=55 // loop_body
              %v1487 = vld [vmem:[%s1485] sm:$0xff]
              %1488 = vst [vmem:[%s1486] sm:$0xff] %v1487
              %v1489 = vld [vmem:[%s1485 + $0x8] sm:$0xff]
              %1490 = vst [vmem:[%s1486 + $0x8] sm:$0xff] %v1489
            $region61: #{snn_forward.1} parent=55 // loop_footer
              %s1484 = sadd.s32 1, %s1480
            $region62: #{snn_forward.1} parent=55 // loop_footer_branch
              %1479 = sbr.rel target = $region58
            $region63: #{snn_forward.1} parent=55 // loop_exit
              _
          $region56: #{snn_forward.1} parent=40 // pred_fallthru
            _
          // Predicated region
          $region64: #{snn_forward.1} parent=40 // pred_check
            _
          $region65: #{snn_forward.1} parent=40 // pred_check_branch
            %1492 = sbr.rel target = $region67
          $region66: #{snn_forward.1} parent=40 // pred_region
            _
          $region67: #{snn_forward.1} parent=40 // pred_fallthru
            _
        $region41: #{snn_forward.1} parent=36 // pred_fallthru
          _
        // Predicated region
        $region42: #{snn_forward.1} parent=36 // pred_check
          _
        $region43: #{snn_forward.1} parent=36 // pred_check_branch
          %1462 = sbr.rel target = $region45
        $region44: #{snn_forward.1} parent=36 // pred_region
          %s1464 = ssub.s32 256, 1
          loop: start=0, step=1, limit=1
          $region46: #{snn_forward.1} parent=44 // loop_pre_header
            _
          $region47: #{snn_forward.1} parent=44 // loop_header
            %s1466 = sphi 0, %s1470
            %p1467 = scmp.ge.s32.totalorder %s1466, 1
            %s1471 = sphi [#allocation3], [#allocation3]
            %s1472 = sphi %s7, %s7
          $region48: #{snn_forward.1} parent=44 // loop_header_branch
            %1469 = sbr.rel (%p1467) target = $region52
          $region49: #{snn_forward.1} parent=44 // loop_body
            %v1473 = vld [vmem:[%s1471] sm:%s1464]
            %1474 = vst [vmem:[%s1472] sm:%s1464] %v1473
            %v1475 = vld [vmem:[%s1471 + $0x8] sm:%s1464]
            %1476 = vst [vmem:[%s1472 + $0x8] sm:%s1464] %v1475
          $region50: #{snn_forward.1} parent=44 // loop_footer
            %s1470 = sadd.s32 1, %s1466
          $region51: #{snn_forward.1} parent=44 // loop_footer_branch
            %1465 = sbr.rel target = $region47
          $region52: #{snn_forward.1} parent=44 // loop_exit
            _
        $region45: #{snn_forward.1} parent=36 // pred_fallthru
          _
      $region37: #{snn_forward.1} parent=32 // pred_fallthru
        _
      %1493 = vnop
    $region33: #{snn_forward.1} parent=1 // pred_fallthru
      _
    // Predicated region
    $region68: #{snn_forward.1} parent=1 // pred_check
      _
    $region69: #{snn_forward.1} parent=1 // pred_check_branch
      %1495 = sbr.rel (0) target = $region71
    $region70: #{snn_forward.1} parent=1 // pred_region
      _
    $region71: #{snn_forward.1} parent=1 // pred_fallthru
      _

</llo_original>
